<compile_context>
chip_gen: v7x
topology: tpu7x:2x2x1
jax: 0.10.0
libtpu: 0.0.40
codegen_flags: <defaults>
</compile_context>

<pallas_src>
import jax
import jax.numpy as jnp
from jax.experimental import pallas as pl
from jax.experimental.pallas import tpu as pltpu

C_FEAT = 2048        # resnet50 output channels
C_LOCAL = 128        # local_conv_out_channels
N_CLASSES = 128      # identity_classes (synthetic)
BN_EPS = 1e-5


# ----------------------------------------------------------------------------
# Kernel
# ----------------------------------------------------------------------------
def _head_kernel(lp_ref, wcat_ref, bias_ref, bfc_ref, local_ref, logits_ref):
    """One batch tile.

    lp_ref   : (Bt, H, C)           bf16  width-averaged feature map
    wcat_ref : (C, C_LOCAL + NC)    bf16  [conv1x1 weight (BN folded) | fc weight]
    bias_ref : (1, C_LOCAL)         f32   conv bias + BN shift, fused
    bfc_ref  : (1, NC)              f32   fc bias
    local_ref: (Bt, H, C_LOCAL)     f32
    logits_ref: (Bt, NC)            f32
    """
    bt, h, c = lp_ref.shape
    nc = logits_ref.shape[-1]

    rows = lp_ref[...].reshape(bt * h, c)                     # (Bt*H, C) bf16

    # One MXU pass covers both heads (N = 128 + NC = 256 fits a single
    # weight-stationary pass on v6e/v7x, two on v5e), f32 accumulation.
    p = jnp.dot(rows, wcat_ref[...],
                preferred_element_type=jnp.float32)           # (Bt*H, 128+NC)

    # local branch: fused bias (conv bias + BN shift) then ReLU.
    local = jnp.maximum(p[:, :C_LOCAL] + bias_ref[...], 0.0)
    local_ref[...] = local.reshape(bt, h, C_LOCAL)

    # fc branch: mean over H of the per-row fc products == fc(mean_{H,W} feat).
    fc_rows = p[:, C_LOCAL:].reshape(bt, h, nc)
    logits_ref[...] = jnp.mean(fc_rows, axis=1) + bfc_ref[...]


# ----------------------------------------------------------------------------
# One-time parameter preparation (call OUTSIDE the per-step jit).
# ----------------------------------------------------------------------------
def prepare_head_params(params):
    """Fold eval-mode BN into the 1x1 conv, cast weights to bf16 and
    concatenate conv/fc weights into one MXU operand.  Do this once."""
    wconv, bconv, gamma, beta, rmean, rvar, wfc, bfc = params
    #   BN(x @ Wc + bc) = x @ (Wc * s) + (s*(bc - mu) + beta),  s = gamma/sqrt(var+eps)
    s = gamma / jnp.sqrt(rvar + BN_EPS)                           # (1, C_LOCAL)
    wconv_f = (wconv * s).astype(jnp.bfloat16)                    # (C, C_LOCAL)
    bias_f = (s * (bconv - rmean) + beta).astype(jnp.float32)     # (1, C_LOCAL)
    wcat = jnp.concatenate([wconv_f, wfc.astype(jnp.bfloat16)], axis=1)  # (C, 128+NC)
    return wcat, bias_f, bfc.astype(jnp.float32)


# ----------------------------------------------------------------------------
# Generation-aware batch-tile selection.
# ----------------------------------------------------------------------------
def _select_bt(B, H, bt_max=None):
    try:
        kind = jax.devices()[0].device_kind.lower()
    except Exception:  # pragma: no cover - defensive
        kind = ""
    if bt_max is None:
        # Fill the MXU M dimension: 128 rows on v5 generations, 256 on v6e/v7x.
        target_rows = 128 if "v5" in kind else 256
        bt_max = max(1, target_rows // max(H, 1))
    bt = max(1, min(B, bt_max))
    # v7x: 2 TensorCores per chip -> need >= 2 grid steps so the "parallel"
    # batch axis actually shards across both cores.
    if "v7" in kind and B > 1:
        bt = max(1, min(bt, pl.cdiv(B, 2)))
    return bt


# ----------------------------------------------------------------------------
# Wrapper
# ----------------------------------------------------------------------------
def reid_head(feat_nchw, prepared, *, bt_max=None):
    """feat_nchw: (B, 2048, H, W) fp32 -- output of the (stubbed) backbone.
    prepared  : output of prepare_head_params()."""
    wcat, bias_f, bfc = prepared
    B, C, H, W = feat_nchw.shape
    assert C == C_FEAT
    nc = wcat.shape[1] - C_LOCAL

    # --- XLA preprocessing (cheap; avoids a full-tensor NCHW->NHWC transpose) ---
    # W-mean while still NCHW: one streaming read of the big tensor.
    local_pre_f32 = jnp.mean(feat_nchw.astype(jnp.float32), axis=3)   # (B, C, H)
    # global feature stays f32 end-to-end (reid embedding output); tiny reduce
    # that fuses with the W-mean above.
    global_feat = jnp.mean(local_pre_f32, axis=2)                     # (B, C)
    # Only the small reduced tensor is transposed; kernel input is bf16 to
    # halve the dominant per-step DMA.
    local_pre = jnp.transpose(local_pre_f32, (0, 2, 1)).astype(jnp.bfloat16)  # (B, H, C)

    # --- batch tiling ---
    bt = _select_bt(B, H, bt_max)
    b_pad = pl.cdiv(B, bt) * bt
    if b_pad != B:
        local_pre = jnp.pad(local_pre, ((0, b_pad - B), (0, 0), (0, 0)))

    out_shapes = (
        jax.ShapeDtypeStruct((b_pad, H, C_LOCAL), jnp.float32),    # local_feat
        jax.ShapeDtypeStruct((b_pad, nc), jnp.float32),            # logits
    )

    grid_spec = pltpu.PrefetchScalarGridSpec(
        num_scalar_prefetch=0,
        grid=(b_pad // bt,),
        in_specs=[
            pl.BlockSpec((bt, H, C), lambda b: (b, 0, 0)),         # local_pre (bf16)
            pl.BlockSpec((C, C_LOCAL + nc), lambda b: (0, 0)),     # fused weights
            pl.BlockSpec((1, C_LOCAL), lambda b: (0, 0)),          # fused conv/BN bias
            pl.BlockSpec((1, nc), lambda b: (0, 0)),               # fc bias
        ],
        out_specs=[
            pl.BlockSpec((bt, H, C_LOCAL), lambda b: (b, 0, 0)),
            pl.BlockSpec((bt, nc), lambda b: (b, 0)),
        ],
    )
    # (Constant-index weight inputs could be pipeline_mode=pl.Buffered(1) to
    #  shave ~1 MiB of VMEM on v7x; footprint is far below the limit here.)

    l, z = pl.pallas_call(
        _head_kernel,
        out_shape=out_shapes,
        grid_spec=grid_spec,
        compiler_params=pltpu.CompilerParams(
            # batch-tile axis is independent -> megacore (v7x 2 TCs) can shard it
            dimension_semantics=("parallel",),
            # bf16 lp tile (<=1 MiB) x2 bufs + ~1 MiB fused weights x2 + outputs
            vmem_limit_bytes=32 * 1024 * 1024,
        ),
    )(local_pre, wcat, bias_f, bfc)

    if b_pad != B:
        l, z = l[:B], z[:B]
    return global_feat, l, z


# ----------------------------------------------------------------------------
# Pure-JAX reference + test harness
# ----------------------------------------------------------------------------
def _ref_forward(feat_nchw, params):
    """Pure-JAX fp32 reference mirroring the PyTorch forward (from `feat` onward)."""
    wconv, bconv, gamma, beta, rmean, rvar, wfc, bfc = params
    feat = feat_nchw.astype(jnp.float32)
    global_feat = jnp.mean(feat, axis=(2, 3))                       # (B, C)
    local = jnp.mean(feat, axis=3)                                  # (B, C, H)
    local = jnp.einsum('bch,co->bho', local, wconv) + bconv         # (B, H, Cl)
    scale = gamma / jnp.sqrt(rvar + BN_EPS)
    shift = beta - rmean * scale
    local = jnp.maximum(local * scale + shift, 0.0)                 # (B, H, Cl)
    logits = global_feat @ wfc + bfc                                # (B, NC)
    return global_feat, local, logits


def _make_params(key):
    k1, k2, k3, k4 = jax.random.split(key, 4)
    # conv1x1: torch weight (Cl, C, 1, 1) -> stored here as (C, Cl) matmul matrix
    wconv = 0.02 * jax.random.normal(k1, (C_FEAT, C_LOCAL), jnp.float32)
    bconv = 0.01 * jax.random.normal(k2, (1, C_LOCAL), jnp.float32)
    # BatchNorm2d defaults: gamma=1, beta=0, running_mean=0, running_var=1
    gamma = jnp.ones((1, C_LOCAL), jnp.float32)
    beta = jnp.zeros((1, C_LOCAL), jnp.float32)
    rmean = jnp.zeros((1, C_LOCAL), jnp.float32)
    rvar = jnp.ones((1, C_LOCAL), jnp.float32)
    # fc: torch weight (NC, 2048) -> stored as (2048, NC)
    wfc = 0.02 * jax.random.normal(k3, (C_FEAT, N_CLASSES), jnp.float32)
    bfc = 0.01 * jax.random.normal(k4, (1, N_CLASSES), jnp.float32)
    return (wconv, bconv, gamma, beta, rmean, rvar, wfc, bfc)


if __name__ == "__main__":
    key = jax.random.PRNGKey(0)
    kf, kp = jax.random.split(key)

    # Typical ReID geometry: 256x128 input through resnet50 (stride 2) -> 8x4 map.
    B, H, W = 16, 8, 4
    # TODO(synk): stands in for self.base(x) (pretrained resnet50), NCHW like PyTorch.
    feat = jax.random.normal(kf, (B, C_FEAT, H, W), jnp.float32)
    params = _make_params(kp)

    # One-time prepare (BN fold, bf16 casts, weight concat) -- outside the jit.
    prepared = prepare_head_params(params)
    prepared = jax.block_until_ready(prepared)

    # bt_max=8 -> two batch tiles of 8, exercising the multi-step "parallel"
    # grid.  Production default (bt_max=None) picks Bt*H ~= 128/256 rows per
    # generation automatically.
    fwd = jax.jit(lambda f: reid_head(f, prepared, bt_max=8))
    global_feat, local_feat, logits = jax.block_until_ready(fwd(feat))

    g_ref, l_ref, z_ref = _ref_forward(feat, params)
    assert global_feat.shape == (B, C_FEAT)
    assert local_feat.shape == (B, H, C_LOCAL)
    assert logits.shape == (B, N_CLASSES)
    # global path is fp32 end-to-end -> tight tolerance
    assert jnp.allclose(global_feat, g_ref, atol=1e-5, rtol=1e-5)
    # local/logits use bf16 MXU operands (fp32 accumulate) -> bf16-level tolerance
    assert jnp.allclose(local_feat, l_ref, atol=1e-2, rtol=1e-2)
    assert jnp.allclose(logits, z_ref, atol=1e-2, rtol=1e-2)

    print("KERNEL_OK")
</pallas_src>

<mosaic_0001>
module attributes {stable_mosaic.version = 11 : i64} {
  func.func @_head_kernel(%arg0: i32, %arg1: memref<8x8x2048xbf16, #tpu.memory_space<vmem>>, %arg2: memref<2048x256xbf16, #tpu.memory_space<vmem>>, %arg3: memref<1x128xf32, #tpu.memory_space<vmem>>, %arg4: memref<1x128xf32, #tpu.memory_space<vmem>>, %arg5: memref<8x8x128xf32, #tpu.memory_space<vmem>>, %arg6: memref<8x128xf32, #tpu.memory_space<vmem>>) attributes {dimension_semantics = [#tpu.dimension_semantics<parallel>], iteration_bounds = array<i64: 2>, scalar_prefetch = 0 : i64, scratch_operands = 0 : i64, tpu.core_type = #tpu.core_type<tc>, window_params = [{transform_indices = @transform_0, window_bounds = array<i64: 8, 8, 2048>}, {pipeline_mode = #tpu.pipeline_mode<synchronous>, transform_indices = @transform_1, window_bounds = array<i64: 2048, 256>}, {pipeline_mode = #tpu.pipeline_mode<synchronous>, transform_indices = @transform_2, window_bounds = array<i64: 1, 128>}, {pipeline_mode = #tpu.pipeline_mode<synchronous>, transform_indices = @transform_3, window_bounds = array<i64: 1, 128>}, {transform_indices = @transform_4, window_bounds = array<i64: 8, 8, 128>}, {transform_indices = @transform_5, window_bounds = array<i64: 8, 128>}]} {
    %c0 = arith.constant 0 : index
    %c0_0 = arith.constant 0 : index
    %c0_1 = arith.constant 0 : index
    %0 = vector.load %arg1[%c0, %c0_0, %c0_1] : memref<8x8x2048xbf16, #tpu.memory_space<vmem>>, vector<8x8x2048xbf16>
    %1 = vector.shape_cast %0 : vector<8x8x2048xbf16> to vector<64x2048xbf16>
    %c0_2 = arith.constant 0 : index
    %c0_3 = arith.constant 0 : index
    %2 = vector.load %arg2[%c0_2, %c0_3] : memref<2048x256xbf16, #tpu.memory_space<vmem>>, vector<2048x256xbf16>
    %cst = arith.constant dense<0.000000e+00> : vector<64x256xf32>
    %3 = tpu.matmul %1, %2, %cst {dimension_numbers = #tpu.dot_dimension_numbers<[1], [0], [0], [1], [0, 0, 1, 1], [], []>} : vector<64x2048xbf16>, vector<2048x256xbf16>, vector<64x256xf32> -> vector<64x256xf32>
    %4 = vector.extract_strided_slice %3 {offsets = [0, 0], sizes = [64, 128], strides = [1, 1]} : vector<64x256xf32> to vector<64x128xf32>
    %c0_4 = arith.constant 0 : index
    %c0_5 = arith.constant 0 : index
    %5 = vector.load %arg3[%c0_4, %c0_5] : memref<1x128xf32, #tpu.memory_space<vmem>>, vector<1x128xf32>
    %6 = vector.broadcast %5 : vector<1x128xf32> to vector<64x128xf32>
    %7 = arith.addf %4, %6 : vector<64x128xf32>
    %cst_6 = arith.constant 0.000000e+00 : f32
    %8 = vector.broadcast %cst_6 : f32 to vector<64x128xf32>
    %9 = arith.maximumf %7, %8 : vector<64x128xf32>
    %10 = vector.shape_cast %9 : vector<64x128xf32> to vector<8x8x128xf32>
    %c0_7 = arith.constant 0 : index
    %c0_8 = arith.constant 0 : index
    %c0_9 = arith.constant 0 : index
    %11 = vector.load %arg5[%c0_7, %c0_8, %c0_9] : memref<8x8x128xf32, #tpu.memory_space<vmem>>, vector<8x8x128xf32>
    tpu.vector_store %arg5[%c0_7, %c0_8, %c0_9], %10 {strides = array<i32>} : memref<8x8x128xf32, #tpu.memory_space<vmem>>, vector<8x8x128xf32>,
    %12 = vector.extract_strided_slice %3 {offsets = [0, 128], sizes = [64, 128], strides = [1, 1]} : vector<64x256xf32> to vector<64x128xf32>
    %13 = vector.shape_cast %12 : vector<64x128xf32> to vector<8x8x128xf32>
    %cst_10 = arith.constant dense<0.000000e+00> : vector<8x128xf32>
    %14 = vector.multi_reduction <add>, %13, %cst_10 [1] : vector<8x8x128xf32> to vector<8x128xf32>
    %cst_11 = arith.constant 8.000000e+00 : f32
    %15 = vector.broadcast %cst_11 : f32 to vector<8x128xf32>
    %16 = arith.divf %14, %15 : vector<8x128xf32>
    %c0_12 = arith.constant 0 : index
    %c0_13 = arith.constant 0 : index
    %17 = vector.load %arg4[%c0_12, %c0_13] : memref<1x128xf32, #tpu.memory_space<vmem>>, vector<1x128xf32>
    %18 = vector.broadcast %17 : vector<1x128xf32> to vector<8x128xf32>
    %19 = arith.addf %16, %18 : vector<8x128xf32>
    %c0_14 = arith.constant 0 : index
    %c0_15 = arith.constant 0 : index
    %20 = vector.load %arg6[%c0_14, %c0_15] : memref<8x128xf32, #tpu.memory_space<vmem>>, vector<8x128xf32>
    tpu.vector_store %arg6[%c0_14, %c0_15], %19 {strides = array<i32>} : memref<8x128xf32, #tpu.memory_space<vmem>>, vector<8x128xf32>,
    return
  }
  func.func @transform_0(%arg0: i32) -> (i32, i32, i32) {
    %c0_i32 = arith.constant 0 : i32
    %c0_i32_0 = arith.constant 0 : i32
    %c0_i32_1 = arith.constant 0 : i32
    return %arg0, %c0_i32, %c0_i32_0 : i32, i32, i32
  }
  func.func @transform_1(%arg0: i32) -> (i32, i32) {
    %c0_i32 = arith.constant 0 : i32
    %c0_i32_0 = arith.constant 0 : i32
    %c0_i32_1 = arith.constant 0 : i32
    return %c0_i32, %c0_i32_0 : i32, i32
  }
  func.func @transform_2(%arg0: i32) -> (i32, i32) {
    %c0_i32 = arith.constant 0 : i32
    %c0_i32_0 = arith.constant 0 : i32
    %c0_i32_1 = arith.constant 0 : i32
    return %c0_i32, %c0_i32_0 : i32, i32
  }
  func.func @transform_3(%arg0: i32) -> (i32, i32) {
    %c0_i32 = arith.constant 0 : i32
    %c0_i32_0 = arith.constant 0 : i32
    %c0_i32_1 = arith.constant 0 : i32
    return %c0_i32, %c0_i32_0 : i32, i32
  }
  func.func @transform_4(%arg0: i32) -> (i32, i32, i32) {
    %c0_i32 = arith.constant 0 : i32
    %c0_i32_0 = arith.constant 0 : i32
    %c0_i32_1 = arith.constant 0 : i32
    return %arg0, %c0_i32, %c0_i32_0 : i32, i32, i32
  }
  func.func @transform_5(%arg0: i32) -> (i32, i32) {
    %c0_i32 = arith.constant 0 : i32
    %c0_i32_0 = arith.constant 0 : i32
    return %arg0, %c0_i32 : i32, i32
  }
}

</mosaic_0001>

<llo_original>
// kernel: _lambda_.1
$region0: #{_lambda_.1}
  #allocation0 [shape = 'u32[]', space=smem, size = 0x4, offset = 0x4, fixed_abs, tag = 'smem constant byte address 0x4 - core index']
  #allocation1 [shape = 'u32[144,128]{1,0:T(1,128)}', space=vmem, size = 0x12000, scoped, tag = 'internal scratch']
  %s0 = inlined_call_operand.vmem [shape: bf16[16,8,2048], index: 0, kind: input, shape index: {}]
  %s1 = inlined_call_operand.vmem [shape: bf16[2048,256], index: 1, kind: input, shape index: {}]
  %s2 = inlined_call_operand.vmem [shape: f32[1,128], index: 2, kind: input, shape index: {}]
  %s3 = inlined_call_operand.vmem [shape: f32[1,128], index: 3, kind: input, shape index: {}]
  %s4 = inlined_call_operand.hbm [shape: f32[16,8,128], index: 4, kind: output, shape index: {0}]
  %s5 = inlined_call_operand.hbm [shape: f32[16,128], index: 5, kind: output, shape index: {1}]
  %6 = xla_tuple %s4, %s5
  %s7 = sld [smem:[#allocation0]]
  $region57: #{_lambda_.1} parent=0
    _
  %s9 = ssub.s32 1, %s7
  %s10 = scalar_select 0, %s9, %s7
  $region1: #{_lambda_.1} parent=0
    #allocation2 [shape = 'u8[65536]{0}', space=vmem, size = 0x10000, scoped, tag = 'output window, operand 0']
    #allocation3 [shape = 's32[2]{0}', space=sflag, size = 0x8, scoped, tag = 'scoped memory for _lambda_.1']
    #allocation4 [shape = 'u8[8192]{0}', space=vmem, size = 0x2000, scoped, tag = 'output window, operand 1']
    #allocation5 [shape = 's32[2]{0}', space=sflag, size = 0x8, scoped, tag = 'scoped memory for _lambda_.1']
    %11 = vsyncpa [#allocation3], 0
    %s12 = scalar_lea.sflag [#allocation3], 1
    %13 = vsyncpa %s12, 0
    %14 = vsyncpa [#allocation5], 0
    %s15 = scalar_lea.sflag [#allocation5], 1
    %16 = vsyncpa %s15, 0
    loop: start=0, step=1, limit=4
    $region2: #{_lambda_.1} parent=1 // loop_pre_header
      _
    $region3: #{_lambda_.1} parent=1 // loop_header
      %s18 = sphi 0, %s22
      %p19 = scmp.ge.s32.totalorder %s18, 4
      %s28 = sphi 0, %s30
      %s31 = sphi 0, %s28
      %s32 = sphi 0, %s31
      %s48 = sphi 0, %s32
      %s52 = sphi 0, %s52
      %s54 = sphi 0, %s52
      %s55 = sphi 0, %s54
      %s69 = sphi 0, %s55
      %s73 = sphi 0, %s73
      %s75 = sphi 0, %s73
      %s76 = sphi 0, %s75
      %s90 = sphi 0, %s76
      %s94 = sphi 0, %s94
      %s96 = sphi 0, %s94
      %s97 = sphi 0, %s96
      %s111 = sphi 0, %s97
      %s117 = sphi 0, %s119
      %s120 = sphi 0, %s117
      %s121 = sphi 0, %s120
      %s137 = sphi 0, %s121
      %s143 = sphi 0, %s145
      %s146 = sphi 0, %s143
      %s147 = sphi 0, %s146
      %s163 = sphi 0, %s147
    $region4: #{_lambda_.1} parent=1 // loop_header_branch
      %21 = sbr.rel (%p19) target = $region8
    $region5: #{_lambda_.1} parent=1 // loop_body
      %s23 = ssub.s32 %s18, 1
      %s24 = ssub.s32 %s18, 2
      %s25 = sadd.s32 %s18, 1
      %s26 = ssub.s32 %s18, %s25
      %p27 = scmp.eq.s32.totalorder %s26, 0
      %s29 = sadd.s32 %s28, 1
      %s30 = scalar_select %p27, %s28, %s29
      %p33 = pneg %p27
      %p34 = scmp.eq.s32.totalorder %s18, 1
      %p35 = por %p33, %p34
      %p36 = scmp.ne.s32.totalorder %s28, %s31
      %p37 = scmp.eq.s32.totalorder %s18, 0
      %p38 = por %p36, %p37
      %p39 = scmp.ne.s32.totalorder %s28, %s31
      %p40 = scmp.eq.s32.totalorder %s23, 1
      %p41 = por %p39, %p40
      %p42 = scmp.ne.s32.totalorder %s31, %s32
      %p43 = scmp.eq.s32.totalorder %s23, 0
      %p44 = por %p42, %p43
      %p45 = scmp.ne.s32.totalorder %s31, %s32
      %p46 = scmp.eq.s32.totalorder %s24, 1
      %p47 = por %p45, %p46
      %p49 = scmp.ne.s32.totalorder %s32, %s48
      %p50 = scmp.eq.s32.totalorder %s24, 0
      %p51 = por %p49, %p50
      %s53 = sadd.s32 %s52, 1
      %p56 = scmp.eq.s32.totalorder %s18, 1
      %p57 = scmp.ne.s32.totalorder %s52, %s54
      %p58 = scmp.eq.s32.totalorder %s18, 0
      %p59 = por %p57, %p58
      %p60 = scmp.ne.s32.totalorder %s52, %s54
      %p61 = scmp.eq.s32.totalorder %s23, 1
      %p62 = por %p60, %p61
      %p63 = scmp.ne.s32.totalorder %s54, %s55
      %p64 = scmp.eq.s32.totalorder %s23, 0
      %p65 = por %p63, %p64
      %p66 = scmp.ne.s32.totalorder %s54, %s55
      %p67 = scmp.eq.s32.totalorder %s24, 1
      %p68 = por %p66, %p67
      %p70 = scmp.ne.s32.totalorder %s55, %s69
      %p71 = scmp.eq.s32.totalorder %s24, 0
      %p72 = por %p70, %p71
      %s74 = sadd.s32 %s73, 1
      %p77 = scmp.eq.s32.totalorder %s18, 1
      %p78 = scmp.ne.s32.totalorder %s73, %s75
      %p79 = scmp.eq.s32.totalorder %s18, 0
      %p80 = por %p78, %p79
      %p81 = scmp.ne.s32.totalorder %s73, %s75
      %p82 = scmp.eq.s32.totalorder %s23, 1
      %p83 = por %p81, %p82
      %p84 = scmp.ne.s32.totalorder %s75, %s76
      %p85 = scmp.eq.s32.totalorder %s23, 0
      %p86 = por %p84, %p85
      %p87 = scmp.ne.s32.totalorder %s75, %s76
      %p88 = scmp.eq.s32.totalorder %s24, 1
      %p89 = por %p87, %p88
      %p91 = scmp.ne.s32.totalorder %s76, %s90
      %p92 = scmp.eq.s32.totalorder %s24, 0
      %p93 = por %p91, %p92
      %s95 = sadd.s32 %s94, 1
      %p98 = scmp.eq.s32.totalorder %s18, 1
      %p99 = scmp.ne.s32.totalorder %s94, %s96
      %p100 = scmp.eq.s32.totalorder %s18, 0
      %p101 = por %p99, %p100
      %p102 = scmp.ne.s32.totalorder %s94, %s96
      %p103 = scmp.eq.s32.totalorder %s23, 1
      %p104 = por %p102, %p103
      %p105 = scmp.ne.s32.totalorder %s96, %s97
      %p106 = scmp.eq.s32.totalorder %s23, 0
      %p107 = por %p105, %p106
      %p108 = scmp.ne.s32.totalorder %s96, %s97
      %p109 = scmp.eq.s32.totalorder %s24, 1
      %p110 = por %p108, %p109
      %p112 = scmp.ne.s32.totalorder %s97, %s111
      %p113 = scmp.eq.s32.totalorder %s24, 0
      %p114 = por %p112, %p113
      %s115 = ssub.s32 %s18, %s25
      %p116 = scmp.eq.s32.totalorder %s115, 0
      %s118 = sadd.s32 %s117, 1
      %s119 = scalar_select %p116, %s117, %s118
      %p122 = pneg %p116
      %p123 = scmp.eq.s32.totalorder %s18, 1
      %p124 = por %p122, %p123
      %p125 = scmp.ne.s32.totalorder %s117, %s120
      %p126 = scmp.eq.s32.totalorder %s18, 0
      %p127 = por %p125, %p126
      %p128 = scmp.ne.s32.totalorder %s117, %s120
      %p129 = scmp.eq.s32.totalorder %s23, 1
      %p130 = por %p128, %p129
      %p131 = scmp.ne.s32.totalorder %s120, %s121
      %p132 = scmp.eq.s32.totalorder %s23, 0
      %p133 = por %p131, %p132
      %p134 = scmp.ne.s32.totalorder %s120, %s121
      %p135 = scmp.eq.s32.totalorder %s24, 1
      %p136 = por %p134, %p135
      %p138 = scmp.ne.s32.totalorder %s121, %s137
      %p139 = scmp.eq.s32.totalorder %s24, 0
      %p140 = por %p138, %p139
      %s141 = ssub.s32 %s18, %s25
      %p142 = scmp.eq.s32.totalorder %s141, 0
      %s144 = sadd.s32 %s143, 1
      %s145 = scalar_select %p142, %s143, %s144
      %p148 = pneg %p142
      %p149 = scmp.eq.s32.totalorder %s18, 1
      %p150 = por %p148, %p149
      %p151 = scmp.ne.s32.totalorder %s143, %s146
      %p152 = scmp.eq.s32.totalorder %s18, 0
      %p153 = por %p151, %p152
      %p154 = scmp.ne.s32.totalorder %s143, %s146
      %p155 = scmp.eq.s32.totalorder %s23, 1
      %p156 = por %p154, %p155
      %p157 = scmp.ne.s32.totalorder %s146, %s147
      %p158 = scmp.eq.s32.totalorder %s23, 0
      %p159 = por %p157, %p158
      %p160 = scmp.ne.s32.totalorder %s146, %s147
      %p161 = scmp.eq.s32.totalorder %s24, 1
      %p162 = por %p160, %p161
      %p164 = scmp.ne.s32.totalorder %s147, %s163
      %p165 = scmp.eq.s32.totalorder %s24, 0
      %p166 = por %p164, %p165
      %p167 = scmp.le.s32.totalorder 1, %s18
      %p168 = scmp.lt.s32.totalorder %s18, 3
      %p169 = pnand %p167, %p168
      %p170 = pneg %p169
      // Predicated region
      $region9: #{_lambda_.1} parent=5 // pred_check
        _
      $region10: #{_lambda_.1} parent=5 // pred_check_branch
        %172 = sbr.rel (%p169) target = $region12
      $region11: #{_lambda_.1} parent=5 // pred_region
        %s173 = ssub.s32 %s18, 1
        // Predicated region
        $region13: #{_lambda_.1} parent=11 // pred_check
          %p174 = pneg %p65
        $region14: #{_lambda_.1} parent=11 // pred_check_branch
          %176 = sbr.rel (%p174) target = $region16
        $region15: #{_lambda_.1} parent=11 // pred_region
          _
        $region16: #{_lambda_.1} parent=11 // pred_fallthru
          _
        // Predicated region
        $region17: #{_lambda_.1} parent=11 // pred_check
          %p177 = pneg %p86
        $region18: #{_lambda_.1} parent=11 // pred_check_branch
          %179 = sbr.rel (%p177) target = $region20
        $region19: #{_lambda_.1} parent=11 // pred_region
          _
        $region20: #{_lambda_.1} parent=11 // pred_fallthru
          _
        // Predicated region
        $region21: #{_lambda_.1} parent=11 // pred_check
          %p180 = pneg %p107
        $region22: #{_lambda_.1} parent=11 // pred_check_branch
          %182 = sbr.rel (%p180) target = $region24
        $region23: #{_lambda_.1} parent=11 // pred_region
          _
        $region24: #{_lambda_.1} parent=11 // pred_fallthru
          _
      $region12: #{_lambda_.1} parent=5 // pred_fallthru
        _
      %p183 = scmp.lt.s32.totalorder %s18, 2
      // Predicated region
      $region25: #{_lambda_.1} parent=5 // pred_check
        %p184 = pneg %p183
      $region26: #{_lambda_.1} parent=5 // pred_check_branch
        %186 = sbr.rel (%p184) target = $region28
      $region27: #{_lambda_.1} parent=5 // pred_region
        // Predicated region
        $region29: #{_lambda_.1} parent=27 // pred_check
          %p187 = pneg %p38
        $region30: #{_lambda_.1} parent=27 // pred_check_branch
          %189 = sbr.rel (%p187) target = $region32
        $region31: #{_lambda_.1} parent=27 // pred_region
          %s190 = smul.u32 8, %s18
          %p191 = scmp.lt.s32.totalorder %s190, 15
          %s192 = scalar_select %p191, %s190, 15
          %s193 = smul.addr %s192, 16
          %s194 = smul.addr %s193, 4
          %s195 = scalar_lea.vmem %s0, %s194
          %s196 = smul.u32 8, %s18
        $region32: #{_lambda_.1} parent=27 // pred_fallthru
          _
      $region28: #{_lambda_.1} parent=5 // pred_fallthru
        _
      %p197 = scmp.le.s32.totalorder 1, %s18
      %p198 = scmp.lt.s32.totalorder %s18, 3
      %p199 = pnand %p197, %p198
      %p200 = pneg %p199
      // Predicated region
      $region33: #{_lambda_.1} parent=5 // pred_check
        _
      $region34: #{_lambda_.1} parent=5 // pred_check_branch
        %202 = sbr.rel (%p199) target = $region36
      $region35: #{_lambda_.1} parent=5 // pred_region
        %s203 = ssub.s32 %s18, 1
        %s204 = smul.u32 8, %s23
        %p205 = scmp.lt.s32.totalorder %s204, 15
        %s206 = scalar_select %p205, %s204, 15
        %s207 = smul.addr %s206, 16
        %s208 = smul.addr %s207, 4
        %s209 = scalar_lea.vmem %s0, %s208
        %p210 = pneg %p44
        %p211 = pneg %p41
        %p212 = pneg %p65
        %p213 = pneg %p62
        %p214 = pneg %p86
        %p215 = pneg %p83
        %p216 = pneg %p107
        %p217 = pneg %p104
        %p218 = pneg %p133
        %p219 = pneg %p130
        %s220 = sand.u32 %s120, 1
        %s221 = scalar_lea.sflag [#allocation3], %s220
        %s222 = sand.u32 %s120, 1
        %s223 = smul.addr %s222, 64
        %s224 = scalar_lea.vmem [#allocation2], %s223
        %p225 = pneg %p159
        %p226 = pneg %p156
        %s227 = sand.u32 %s146, 1
        %s228 = scalar_lea.sflag [#allocation5], %s227
        %s229 = sand.u32 %s146, 1
        %s230 = smul.addr %s229, 8
        %s231 = scalar_lea.vmem [#allocation4], %s230
        %s232 = smul.u32 8, %s23
        %p233 = scmp.lt.s32.totalorder %s232, 15
        %s234 = scalar_select %p233, %s232, 15
        %s235 = smul.addr %s234, 16
        %s236 = smul.addr %s235, 4
        %s237 = scalar_lea.vmem %s0, %s236
        %s238 = smul.u32 8, %s23
        %s239 = smul.u32 8, %s23
        %v240 = vld [vmem:[%s237] sm:$0xff]
        %v241 = vld [vmem:[%s237 + $0x8] sm:$0xff]
        %v242 = vld [vmem:[%s237 + $0x10] sm:$0xff]
        %v243 = vld [vmem:[%s237 + $0x18] sm:$0xff]
        %v244 = vld [vmem:[%s237 + $0x20] sm:$0xff]
        %v245 = vld [vmem:[%s237 + $0x28] sm:$0xff]
        %v246 = vld [vmem:[%s237 + $0x30] sm:$0xff]
        %v247 = vld [vmem:[%s237 + $0x38] sm:$0xff]
        %v248 = vld [vmem:[%s237 + $0x40] sm:$0xff]
        %v249 = vld [vmem:[%s237 + $0x48] sm:$0xff]
        %v250 = vld [vmem:[%s237 + $0x50] sm:$0xff]
        %v251 = vld [vmem:[%s237 + $0x58] sm:$0xff]
        %v252 = vld [vmem:[%s237 + $0x60] sm:$0xff]
        %v253 = vld [vmem:[%s237 + $0x68] sm:$0xff]
        %v254 = vld [vmem:[%s237 + $0x70] sm:$0xff]
        %v255 = vld [vmem:[%s237 + $0x78] sm:$0xff]
        %v256 = vld [vmem:[%s237 + $0x80] sm:$0xff]
        %v257 = vld [vmem:[%s237 + $0x88] sm:$0xff]
        %v258 = vld [vmem:[%s237 + $0x90] sm:$0xff]
        %v259 = vld [vmem:[%s237 + $0x98] sm:$0xff]
        %v260 = vld [vmem:[%s237 + $0xa0] sm:$0xff]
        %v261 = vld [vmem:[%s237 + $0xa8] sm:$0xff]
        %v262 = vld [vmem:[%s237 + $0xb0] sm:$0xff]
        %v263 = vld [vmem:[%s237 + $0xb8] sm:$0xff]
        %v264 = vld [vmem:[%s237 + $0xc0] sm:$0xff]
        %v265 = vld [vmem:[%s237 + $0xc8] sm:$0xff]
        %v266 = vld [vmem:[%s237 + $0xd0] sm:$0xff]
        %v267 = vld [vmem:[%s237 + $0xd8] sm:$0xff]
        %v268 = vld [vmem:[%s237 + $0xe0] sm:$0xff]
        %v269 = vld [vmem:[%s237 + $0xe8] sm:$0xff]
        %v270 = vld [vmem:[%s237 + $0xf0] sm:$0xff]
        %v271 = vld [vmem:[%s237 + $0xf8] sm:$0xff]
        %v272 = vld [vmem:[%s237 + $0x100] sm:$0xff]
        %v273 = vld [vmem:[%s237 + $0x108] sm:$0xff]
        %v274 = vld [vmem:[%s237 + $0x110] sm:$0xff]
        %v275 = vld [vmem:[%s237 + $0x118] sm:$0xff]
        %v276 = vld [vmem:[%s237 + $0x120] sm:$0xff]
        %v277 = vld [vmem:[%s237 + $0x128] sm:$0xff]
        %v278 = vld [vmem:[%s237 + $0x130] sm:$0xff]
        %v279 = vld [vmem:[%s237 + $0x138] sm:$0xff]
        %v280 = vld [vmem:[%s237 + $0x140] sm:$0xff]
        %v281 = vld [vmem:[%s237 + $0x148] sm:$0xff]
        %v282 = vld [vmem:[%s237 + $0x150] sm:$0xff]
        %v283 = vld [vmem:[%s237 + $0x158] sm:$0xff]
        %v284 = vld [vmem:[%s237 + $0x160] sm:$0xff]
        %v285 = vld [vmem:[%s237 + $0x168] sm:$0xff]
        %v286 = vld [vmem:[%s237 + $0x170] sm:$0xff]
        %v287 = vld [vmem:[%s237 + $0x178] sm:$0xff]
        %v288 = vld [vmem:[%s237 + $0x180] sm:$0xff]
        %v289 = vld [vmem:[%s237 + $0x188] sm:$0xff]
        %v290 = vld [vmem:[%s237 + $0x190] sm:$0xff]
        %v291 = vld [vmem:[%s237 + $0x198] sm:$0xff]
        %v292 = vld [vmem:[%s237 + $0x1a0] sm:$0xff]
        %v293 = vld [vmem:[%s237 + $0x1a8] sm:$0xff]
        %v294 = vld [vmem:[%s237 + $0x1b0] sm:$0xff]
        %v295 = vld [vmem:[%s237 + $0x1b8] sm:$0xff]
        %v296 = vld [vmem:[%s237 + $0x1c0] sm:$0xff]
        %v297 = vld [vmem:[%s237 + $0x1c8] sm:$0xff]
        %v298 = vld [vmem:[%s237 + $0x1d0] sm:$0xff]
        %v299 = vld [vmem:[%s237 + $0x1d8] sm:$0xff]
        %v300 = vld [vmem:[%s237 + $0x1e0] sm:$0xff]
        %v301 = vld [vmem:[%s237 + $0x1e8] sm:$0xff]
        %v302 = vld [vmem:[%s237 + $0x1f0] sm:$0xff]
        %v303 = vld [vmem:[%s237 + $0x1f8] sm:$0xff]
        %v304 = vld [vmem:[%s1] sm:$0xff]
        %v305 = vld [vmem:[%s1 + $0x8] sm:$0xff]
        %v306 = vld [vmem:[%s1 + $0x10] sm:$0xff]
        %v307 = vld [vmem:[%s1 + $0x18] sm:$0xff]
        %v308 = vld [vmem:[%s1 + $0x20] sm:$0xff]
        %v309 = vld [vmem:[%s1 + $0x28] sm:$0xff]
        %v310 = vld [vmem:[%s1 + $0x30] sm:$0xff]
        %v311 = vld [vmem:[%s1 + $0x38] sm:$0xff]
        %v312 = vld [vmem:[%s1 + $0x40] sm:$0xff]
        %v313 = vld [vmem:[%s1 + $0x48] sm:$0xff]
        %v314 = vld [vmem:[%s1 + $0x50] sm:$0xff]
        %v315 = vld [vmem:[%s1 + $0x58] sm:$0xff]
        %v316 = vld [vmem:[%s1 + $0x60] sm:$0xff]
        %v317 = vld [vmem:[%s1 + $0x68] sm:$0xff]
        %v318 = vld [vmem:[%s1 + $0x70] sm:$0xff]
        %v319 = vld [vmem:[%s1 + $0x78] sm:$0xff]
        %v320 = vld [vmem:[%s1 + $0x80] sm:$0xff]
        %v321 = vld [vmem:[%s1 + $0x88] sm:$0xff]
        %v322 = vld [vmem:[%s1 + $0x90] sm:$0xff]
        %v323 = vld [vmem:[%s1 + $0x98] sm:$0xff]
        %v324 = vld [vmem:[%s1 + $0xa0] sm:$0xff]
        %v325 = vld [vmem:[%s1 + $0xa8] sm:$0xff]
        %v326 = vld [vmem:[%s1 + $0xb0] sm:$0xff]
        %v327 = vld [vmem:[%s1 + $0xb8] sm:$0xff]
        %v328 = vld [vmem:[%s1 + $0xc0] sm:$0xff]
        %v329 = vld [vmem:[%s1 + $0xc8] sm:$0xff]
        %v330 = vld [vmem:[%s1 + $0xd0] sm:$0xff]
        %v331 = vld [vmem:[%s1 + $0xd8] sm:$0xff]
        %v332 = vld [vmem:[%s1 + $0xe0] sm:$0xff]
        %v333 = vld [vmem:[%s1 + $0xe8] sm:$0xff]
        %v334 = vld [vmem:[%s1 + $0xf0] sm:$0xff]
        %v335 = vld [vmem:[%s1 + $0xf8] sm:$0xff]
        %v336 = vld [vmem:[%s1 + $0x100] sm:$0xff]
        %v337 = vld [vmem:[%s1 + $0x108] sm:$0xff]
        %v338 = vld [vmem:[%s1 + $0x110] sm:$0xff]
        %v339 = vld [vmem:[%s1 + $0x118] sm:$0xff]
        %v340 = vld [vmem:[%s1 + $0x120] sm:$0xff]
        %v341 = vld [vmem:[%s1 + $0x128] sm:$0xff]
        %v342 = vld [vmem:[%s1 + $0x130] sm:$0xff]
        %v343 = vld [vmem:[%s1 + $0x138] sm:$0xff]
        %v344 = vld [vmem:[%s1 + $0x140] sm:$0xff]
        %v345 = vld [vmem:[%s1 + $0x148] sm:$0xff]
        %v346 = vld [vmem:[%s1 + $0x150] sm:$0xff]
        %v347 = vld [vmem:[%s1 + $0x158] sm:$0xff]
        %v348 = vld [vmem:[%s1 + $0x160] sm:$0xff]
        %v349 = vld [vmem:[%s1 + $0x168] sm:$0xff]
        %v350 = vld [vmem:[%s1 + $0x170] sm:$0xff]
        %v351 = vld [vmem:[%s1 + $0x178] sm:$0xff]
        %v352 = vld [vmem:[%s1 + $0x180] sm:$0xff]
        %v353 = vld [vmem:[%s1 + $0x188] sm:$0xff]
        %v354 = vld [vmem:[%s1 + $0x190] sm:$0xff]
        %v355 = vld [vmem:[%s1 + $0x198] sm:$0xff]
        %v356 = vld [vmem:[%s1 + $0x1a0] sm:$0xff]
        %v357 = vld [vmem:[%s1 + $0x1a8] sm:$0xff]
        %v358 = vld [vmem:[%s1 + $0x1b0] sm:$0xff]
        %v359 = vld [vmem:[%s1 + $0x1b8] sm:$0xff]
        %v360 = vld [vmem:[%s1 + $0x1c0] sm:$0xff]
        %v361 = vld [vmem:[%s1 + $0x1c8] sm:$0xff]
        %v362 = vld [vmem:[%s1 + $0x1d0] sm:$0xff]
        %v363 = vld [vmem:[%s1 + $0x1d8] sm:$0xff]
        %v364 = vld [vmem:[%s1 + $0x1e0] sm:$0xff]
        %v365 = vld [vmem:[%s1 + $0x1e8] sm:$0xff]
        %v366 = vld [vmem:[%s1 + $0x1f0] sm:$0xff]
        %v367 = vld [vmem:[%s1 + $0x1f8] sm:$0xff]
        %v368 = vld [vmem:[%s1 + $0x200] sm:$0xff]
        %v369 = vld [vmem:[%s1 + $0x208] sm:$0xff]
        %v370 = vld [vmem:[%s1 + $0x210] sm:$0xff]
        %v371 = vld [vmem:[%s1 + $0x218] sm:$0xff]
        %v372 = vld [vmem:[%s1 + $0x220] sm:$0xff]
        %v373 = vld [vmem:[%s1 + $0x228] sm:$0xff]
        %v374 = vld [vmem:[%s1 + $0x230] sm:$0xff]
        %v375 = vld [vmem:[%s1 + $0x238] sm:$0xff]
        %v376 = vld [vmem:[%s1 + $0x240] sm:$0xff]
        %v377 = vld [vmem:[%s1 + $0x248] sm:$0xff]
        %v378 = vld [vmem:[%s1 + $0x250] sm:$0xff]
        %v379 = vld [vmem:[%s1 + $0x258] sm:$0xff]
        %v380 = vld [vmem:[%s1 + $0x260] sm:$0xff]
        %v381 = vld [vmem:[%s1 + $0x268] sm:$0xff]
        %v382 = vld [vmem:[%s1 + $0x270] sm:$0xff]
        %v383 = vld [vmem:[%s1 + $0x278] sm:$0xff]
        %v384 = vld [vmem:[%s1 + $0x280] sm:$0xff]
        %v385 = vld [vmem:[%s1 + $0x288] sm:$0xff]
        %v386 = vld [vmem:[%s1 + $0x290] sm:$0xff]
        %v387 = vld [vmem:[%s1 + $0x298] sm:$0xff]
        %v388 = vld [vmem:[%s1 + $0x2a0] sm:$0xff]
        %v389 = vld [vmem:[%s1 + $0x2a8] sm:$0xff]
        %v390 = vld [vmem:[%s1 + $0x2b0] sm:$0xff]
        %v391 = vld [vmem:[%s1 + $0x2b8] sm:$0xff]
        %v392 = vld [vmem:[%s1 + $0x2c0] sm:$0xff]
        %v393 = vld [vmem:[%s1 + $0x2c8] sm:$0xff]
        %v394 = vld [vmem:[%s1 + $0x2d0] sm:$0xff]
        %v395 = vld [vmem:[%s1 + $0x2d8] sm:$0xff]
        %v396 = vld [vmem:[%s1 + $0x2e0] sm:$0xff]
        %v397 = vld [vmem:[%s1 + $0x2e8] sm:$0xff]
        %v398 = vld [vmem:[%s1 + $0x2f0] sm:$0xff]
        %v399 = vld [vmem:[%s1 + $0x2f8] sm:$0xff]
        %v400 = vld [vmem:[%s1 + $0x300] sm:$0xff]
        %v401 = vld [vmem:[%s1 + $0x308] sm:$0xff]
        %v402 = vld [vmem:[%s1 + $0x310] sm:$0xff]
        %v403 = vld [vmem:[%s1 + $0x318] sm:$0xff]
        %v404 = vld [vmem:[%s1 + $0x320] sm:$0xff]
        %v405 = vld [vmem:[%s1 + $0x328] sm:$0xff]
        %v406 = vld [vmem:[%s1 + $0x330] sm:$0xff]
        %v407 = vld [vmem:[%s1 + $0x338] sm:$0xff]
        %v408 = vld [vmem:[%s1 + $0x340] sm:$0xff]
        %v409 = vld [vmem:[%s1 + $0x348] sm:$0xff]
        %v410 = vld [vmem:[%s1 + $0x350] sm:$0xff]
        %v411 = vld [vmem:[%s1 + $0x358] sm:$0xff]
        %v412 = vld [vmem:[%s1 + $0x360] sm:$0xff]
        %v413 = vld [vmem:[%s1 + $0x368] sm:$0xff]
        %v414 = vld [vmem:[%s1 + $0x370] sm:$0xff]
        %v415 = vld [vmem:[%s1 + $0x378] sm:$0xff]
        %v416 = vld [vmem:[%s1 + $0x380] sm:$0xff]
        %v417 = vld [vmem:[%s1 + $0x388] sm:$0xff]
        %v418 = vld [vmem:[%s1 + $0x390] sm:$0xff]
        %v419 = vld [vmem:[%s1 + $0x398] sm:$0xff]
        %v420 = vld [vmem:[%s1 + $0x3a0] sm:$0xff]
        %v421 = vld [vmem:[%s1 + $0x3a8] sm:$0xff]
        %v422 = vld [vmem:[%s1 + $0x3b0] sm:$0xff]
        %v423 = vld [vmem:[%s1 + $0x3b8] sm:$0xff]
        %v424 = vld [vmem:[%s1 + $0x3c0] sm:$0xff]
        %v425 = vld [vmem:[%s1 + $0x3c8] sm:$0xff]
        %v426 = vld [vmem:[%s1 + $0x3d0] sm:$0xff]
        %v427 = vld [vmem:[%s1 + $0x3d8] sm:$0xff]
        %v428 = vld [vmem:[%s1 + $0x3e0] sm:$0xff]
        %v429 = vld [vmem:[%s1 + $0x3e8] sm:$0xff]
        %v430 = vld [vmem:[%s1 + $0x3f0] sm:$0xff]
        %v431 = vld [vmem:[%s1 + $0x3f8] sm:$0xff]
        %v432 = vld [vmem:[%s1 + $0x400] sm:$0xff]
        %v433 = vld [vmem:[%s1 + $0x408] sm:$0xff]
        %v434 = vld [vmem:[%s1 + $0x410] sm:$0xff]
        %v435 = vld [vmem:[%s1 + $0x418] sm:$0xff]
        %v436 = vld [vmem:[%s1 + $0x420] sm:$0xff]
        %v437 = vld [vmem:[%s1 + $0x428] sm:$0xff]
        %v438 = vld [vmem:[%s1 + $0x430] sm:$0xff]
        %v439 = vld [vmem:[%s1 + $0x438] sm:$0xff]
        %v440 = vld [vmem:[%s1 + $0x440] sm:$0xff]
        %v441 = vld [vmem:[%s1 + $0x448] sm:$0xff]
        %v442 = vld [vmem:[%s1 + $0x450] sm:$0xff]
        %v443 = vld [vmem:[%s1 + $0x458] sm:$0xff]
        %v444 = vld [vmem:[%s1 + $0x460] sm:$0xff]
        %v445 = vld [vmem:[%s1 + $0x468] sm:$0xff]
        %v446 = vld [vmem:[%s1 + $0x470] sm:$0xff]
        %v447 = vld [vmem:[%s1 + $0x478] sm:$0xff]
        %v448 = vld [vmem:[%s1 + $0x480] sm:$0xff]
        %v449 = vld [vmem:[%s1 + $0x488] sm:$0xff]
        %v450 = vld [vmem:[%s1 + $0x490] sm:$0xff]
        %v451 = vld [vmem:[%s1 + $0x498] sm:$0xff]
        %v452 = vld [vmem:[%s1 + $0x4a0] sm:$0xff]
        %v453 = vld [vmem:[%s1 + $0x4a8] sm:$0xff]
        %v454 = vld [vmem:[%s1 + $0x4b0] sm:$0xff]
        %v455 = vld [vmem:[%s1 + $0x4b8] sm:$0xff]
        %v456 = vld [vmem:[%s1 + $0x4c0] sm:$0xff]
        %v457 = vld [vmem:[%s1 + $0x4c8] sm:$0xff]
        %v458 = vld [vmem:[%s1 + $0x4d0] sm:$0xff]
        %v459 = vld [vmem:[%s1 + $0x4d8] sm:$0xff]
        %v460 = vld [vmem:[%s1 + $0x4e0] sm:$0xff]
        %v461 = vld [vmem:[%s1 + $0x4e8] sm:$0xff]
        %v462 = vld [vmem:[%s1 + $0x4f0] sm:$0xff]
        %v463 = vld [vmem:[%s1 + $0x4f8] sm:$0xff]
        %v464 = vld [vmem:[%s1 + $0x500] sm:$0xff]
        %v465 = vld [vmem:[%s1 + $0x508] sm:$0xff]
        %v466 = vld [vmem:[%s1 + $0x510] sm:$0xff]
        %v467 = vld [vmem:[%s1 + $0x518] sm:$0xff]
        %v468 = vld [vmem:[%s1 + $0x520] sm:$0xff]
        %v469 = vld [vmem:[%s1 + $0x528] sm:$0xff]
        %v470 = vld [vmem:[%s1 + $0x530] sm:$0xff]
        %v471 = vld [vmem:[%s1 + $0x538] sm:$0xff]
        %v472 = vld [vmem:[%s1 + $0x540] sm:$0xff]
        %v473 = vld [vmem:[%s1 + $0x548] sm:$0xff]
        %v474 = vld [vmem:[%s1 + $0x550] sm:$0xff]
        %v475 = vld [vmem:[%s1 + $0x558] sm:$0xff]
        %v476 = vld [vmem:[%s1 + $0x560] sm:$0xff]
        %v477 = vld [vmem:[%s1 + $0x568] sm:$0xff]
        %v478 = vld [vmem:[%s1 + $0x570] sm:$0xff]
        %v479 = vld [vmem:[%s1 + $0x578] sm:$0xff]
        %v480 = vld [vmem:[%s1 + $0x580] sm:$0xff]
        %v481 = vld [vmem:[%s1 + $0x588] sm:$0xff]
        %v482 = vld [vmem:[%s1 + $0x590] sm:$0xff]
        %v483 = vld [vmem:[%s1 + $0x598] sm:$0xff]
        %v484 = vld [vmem:[%s1 + $0x5a0] sm:$0xff]
        %v485 = vld [vmem:[%s1 + $0x5a8] sm:$0xff]
        %v486 = vld [vmem:[%s1 + $0x5b0] sm:$0xff]
        %v487 = vld [vmem:[%s1 + $0x5b8] sm:$0xff]
        %v488 = vld [vmem:[%s1 + $0x5c0] sm:$0xff]
        %v489 = vld [vmem:[%s1 + $0x5c8] sm:$0xff]
        %v490 = vld [vmem:[%s1 + $0x5d0] sm:$0xff]
        %v491 = vld [vmem:[%s1 + $0x5d8] sm:$0xff]
        %v492 = vld [vmem:[%s1 + $0x5e0] sm:$0xff]
        %v493 = vld [vmem:[%s1 + $0x5e8] sm:$0xff]
        %v494 = vld [vmem:[%s1 + $0x5f0] sm:$0xff]
        %v495 = vld [vmem:[%s1 + $0x5f8] sm:$0xff]
        %v496 = vld [vmem:[%s1 + $0x600] sm:$0xff]
        %v497 = vld [vmem:[%s1 + $0x608] sm:$0xff]
        %v498 = vld [vmem:[%s1 + $0x610] sm:$0xff]
        %v499 = vld [vmem:[%s1 + $0x618] sm:$0xff]
        %v500 = vld [vmem:[%s1 + $0x620] sm:$0xff]
        %v501 = vld [vmem:[%s1 + $0x628] sm:$0xff]
        %v502 = vld [vmem:[%s1 + $0x630] sm:$0xff]
        %v503 = vld [vmem:[%s1 + $0x638] sm:$0xff]
        %v504 = vld [vmem:[%s1 + $0x640] sm:$0xff]
        %v505 = vld [vmem:[%s1 + $0x648] sm:$0xff]
        %v506 = vld [vmem:[%s1 + $0x650] sm:$0xff]
        %v507 = vld [vmem:[%s1 + $0x658] sm:$0xff]
        %v508 = vld [vmem:[%s1 + $0x660] sm:$0xff]
        %v509 = vld [vmem:[%s1 + $0x668] sm:$0xff]
        %v510 = vld [vmem:[%s1 + $0x670] sm:$0xff]
        %v511 = vld [vmem:[%s1 + $0x678] sm:$0xff]
        %v512 = vld [vmem:[%s1 + $0x680] sm:$0xff]
        %v513 = vld [vmem:[%s1 + $0x688] sm:$0xff]
        %v514 = vld [vmem:[%s1 + $0x690] sm:$0xff]
        %v515 = vld [vmem:[%s1 + $0x698] sm:$0xff]
        %v516 = vld [vmem:[%s1 + $0x6a0] sm:$0xff]
        %v517 = vld [vmem:[%s1 + $0x6a8] sm:$0xff]
        %v518 = vld [vmem:[%s1 + $0x6b0] sm:$0xff]
        %v519 = vld [vmem:[%s1 + $0x6b8] sm:$0xff]
        %v520 = vld [vmem:[%s1 + $0x6c0] sm:$0xff]
        %v521 = vld [vmem:[%s1 + $0x6c8] sm:$0xff]
        %v522 = vld [vmem:[%s1 + $0x6d0] sm:$0xff]
        %v523 = vld [vmem:[%s1 + $0x6d8] sm:$0xff]
        %v524 = vld [vmem:[%s1 + $0x6e0] sm:$0xff]
        %v525 = vld [vmem:[%s1 + $0x6e8] sm:$0xff]
        %v526 = vld [vmem:[%s1 + $0x6f0] sm:$0xff]
        %v527 = vld [vmem:[%s1 + $0x6f8] sm:$0xff]
        %v528 = vld [vmem:[%s1 + $0x700] sm:$0xff]
        %v529 = vld [vmem:[%s1 + $0x708] sm:$0xff]
        %v530 = vld [vmem:[%s1 + $0x710] sm:$0xff]
        %v531 = vld [vmem:[%s1 + $0x718] sm:$0xff]
        %v532 = vld [vmem:[%s1 + $0x720] sm:$0xff]
        %v533 = vld [vmem:[%s1 + $0x728] sm:$0xff]
        %v534 = vld [vmem:[%s1 + $0x730] sm:$0xff]
        %v535 = vld [vmem:[%s1 + $0x738] sm:$0xff]
        %v536 = vld [vmem:[%s1 + $0x740] sm:$0xff]
        %v537 = vld [vmem:[%s1 + $0x748] sm:$0xff]
        %v538 = vld [vmem:[%s1 + $0x750] sm:$0xff]
        %v539 = vld [vmem:[%s1 + $0x758] sm:$0xff]
        %v540 = vld [vmem:[%s1 + $0x760] sm:$0xff]
        %v541 = vld [vmem:[%s1 + $0x768] sm:$0xff]
        %v542 = vld [vmem:[%s1 + $0x770] sm:$0xff]
        %v543 = vld [vmem:[%s1 + $0x778] sm:$0xff]
        %v544 = vld [vmem:[%s1 + $0x780] sm:$0xff]
        %v545 = vld [vmem:[%s1 + $0x788] sm:$0xff]
        %v546 = vld [vmem:[%s1 + $0x790] sm:$0xff]
        %v547 = vld [vmem:[%s1 + $0x798] sm:$0xff]
        %v548 = vld [vmem:[%s1 + $0x7a0] sm:$0xff]
        %v549 = vld [vmem:[%s1 + $0x7a8] sm:$0xff]
        %v550 = vld [vmem:[%s1 + $0x7b0] sm:$0xff]
        %v551 = vld [vmem:[%s1 + $0x7b8] sm:$0xff]
        %v552 = vld [vmem:[%s1 + $0x7c0] sm:$0xff]
        %v553 = vld [vmem:[%s1 + $0x7c8] sm:$0xff]
        %v554 = vld [vmem:[%s1 + $0x7d0] sm:$0xff]
        %v555 = vld [vmem:[%s1 + $0x7d8] sm:$0xff]
        %v556 = vld [vmem:[%s1 + $0x7e0] sm:$0xff]
        %v557 = vld [vmem:[%s1 + $0x7e8] sm:$0xff]
        %v558 = vld [vmem:[%s1 + $0x7f0] sm:$0xff]
        %v559 = vld [vmem:[%s1 + $0x7f8] sm:$0xff]
        %v624 = vunpack.c.l.b16 %v240
        %v625 = vunpack.c.h.b16 %v240
        %v626 = vunpack.c.l.b16 %v241
        %v627 = vunpack.c.h.b16 %v241
        %v628 = vunpack.c.l.b16 %v242
        %v629 = vunpack.c.h.b16 %v242
        %v630 = vunpack.c.l.b16 %v243
        %v631 = vunpack.c.h.b16 %v243
        %v632 = vunpack.c.l.b16 %v244
        %v633 = vunpack.c.h.b16 %v244
        %v634 = vunpack.c.l.b16 %v245
        %v635 = vunpack.c.h.b16 %v245
        %v636 = vunpack.c.l.b16 %v246
        %v637 = vunpack.c.h.b16 %v246
        %v638 = vunpack.c.l.b16 %v247
        %v639 = vunpack.c.h.b16 %v247
        %v640 = vunpack.c.l.b16 %v248
        %v641 = vunpack.c.h.b16 %v248
        %v642 = vunpack.c.l.b16 %v249
        %v643 = vunpack.c.h.b16 %v249
        %v644 = vunpack.c.l.b16 %v250
        %v645 = vunpack.c.h.b16 %v250
        %v646 = vunpack.c.l.b16 %v251
        %v647 = vunpack.c.h.b16 %v251
        %v648 = vunpack.c.l.b16 %v252
        %v649 = vunpack.c.h.b16 %v252
        %v650 = vunpack.c.l.b16 %v253
        %v651 = vunpack.c.h.b16 %v253
        %v652 = vunpack.c.l.b16 %v254
        %v653 = vunpack.c.h.b16 %v254
        %v654 = vunpack.c.l.b16 %v255
        %v655 = vunpack.c.h.b16 %v255
        %v656 = vunpack.c.l.b16 %v256
        %v657 = vunpack.c.h.b16 %v256
        %v658 = vunpack.c.l.b16 %v257
        %v659 = vunpack.c.h.b16 %v257
        %v660 = vunpack.c.l.b16 %v258
        %v661 = vunpack.c.h.b16 %v258
        %v662 = vunpack.c.l.b16 %v259
        %v663 = vunpack.c.h.b16 %v259
        %v664 = vunpack.c.l.b16 %v260
        %v665 = vunpack.c.h.b16 %v260
        %v666 = vunpack.c.l.b16 %v261
        %v667 = vunpack.c.h.b16 %v261
        %v668 = vunpack.c.l.b16 %v262
        %v669 = vunpack.c.h.b16 %v262
        %v670 = vunpack.c.l.b16 %v263
        %v671 = vunpack.c.h.b16 %v263
        %v672 = vunpack.c.l.b16 %v264
        %v673 = vunpack.c.h.b16 %v264
        %v674 = vunpack.c.l.b16 %v265
        %v675 = vunpack.c.h.b16 %v265
        %v676 = vunpack.c.l.b16 %v266
        %v677 = vunpack.c.h.b16 %v266
        %v678 = vunpack.c.l.b16 %v267
        %v679 = vunpack.c.h.b16 %v267
        %v680 = vunpack.c.l.b16 %v268
        %v681 = vunpack.c.h.b16 %v268
        %v682 = vunpack.c.l.b16 %v269
        %v683 = vunpack.c.h.b16 %v269
        %v684 = vunpack.c.l.b16 %v270
        %v685 = vunpack.c.h.b16 %v270
        %v686 = vunpack.c.l.b16 %v271
        %v687 = vunpack.c.h.b16 %v271
        %v688 = vunpack.c.l.b16 %v272
        %v689 = vunpack.c.h.b16 %v272
        %v690 = vunpack.c.l.b16 %v273
        %v691 = vunpack.c.h.b16 %v273
        %v692 = vunpack.c.l.b16 %v274
        %v693 = vunpack.c.h.b16 %v274
        %v694 = vunpack.c.l.b16 %v275
        %v695 = vunpack.c.h.b16 %v275
        %v696 = vunpack.c.l.b16 %v276
        %v697 = vunpack.c.h.b16 %v276
        %v698 = vunpack.c.l.b16 %v277
        %v699 = vunpack.c.h.b16 %v277
        %v700 = vunpack.c.l.b16 %v278
        %v701 = vunpack.c.h.b16 %v278
        %v702 = vunpack.c.l.b16 %v279
        %v703 = vunpack.c.h.b16 %v279
        %v704 = vunpack.c.l.b16 %v280
        %v705 = vunpack.c.h.b16 %v280
        %v706 = vunpack.c.l.b16 %v281
        %v707 = vunpack.c.h.b16 %v281
        %v708 = vunpack.c.l.b16 %v282
        %v709 = vunpack.c.h.b16 %v282
        %v710 = vunpack.c.l.b16 %v283
        %v711 = vunpack.c.h.b16 %v283
        %v712 = vunpack.c.l.b16 %v284
        %v713 = vunpack.c.h.b16 %v284
        %v714 = vunpack.c.l.b16 %v285
        %v715 = vunpack.c.h.b16 %v285
        %v716 = vunpack.c.l.b16 %v286
        %v717 = vunpack.c.h.b16 %v286
        %v718 = vunpack.c.l.b16 %v287
        %v719 = vunpack.c.h.b16 %v287
        %v720 = vunpack.c.l.b16 %v288
        %v721 = vunpack.c.h.b16 %v288
        %v722 = vunpack.c.l.b16 %v289
        %v723 = vunpack.c.h.b16 %v289
        %v724 = vunpack.c.l.b16 %v290
        %v725 = vunpack.c.h.b16 %v290
        %v726 = vunpack.c.l.b16 %v291
        %v727 = vunpack.c.h.b16 %v291
        %v728 = vunpack.c.l.b16 %v292
        %v729 = vunpack.c.h.b16 %v292
        %v730 = vunpack.c.l.b16 %v293
        %v731 = vunpack.c.h.b16 %v293
        %v732 = vunpack.c.l.b16 %v294
        %v733 = vunpack.c.h.b16 %v294
        %v734 = vunpack.c.l.b16 %v295
        %v735 = vunpack.c.h.b16 %v295
        %v736 = vunpack.c.l.b16 %v296
        %v737 = vunpack.c.h.b16 %v296
        %v738 = vunpack.c.l.b16 %v297
        %v739 = vunpack.c.h.b16 %v297
        %v740 = vunpack.c.l.b16 %v298
        %v741 = vunpack.c.h.b16 %v298
        %v742 = vunpack.c.l.b16 %v299
        %v743 = vunpack.c.h.b16 %v299
        %v744 = vunpack.c.l.b16 %v300
        %v745 = vunpack.c.h.b16 %v300
        %v746 = vunpack.c.l.b16 %v301
        %v747 = vunpack.c.h.b16 %v301
        %v748 = vunpack.c.l.b16 %v302
        %v749 = vunpack.c.h.b16 %v302
        %v750 = vunpack.c.l.b16 %v303
        %v751 = vunpack.c.h.b16 %v303
        %v752 = vpack.c.b16 %v640, %v624
        %v753 = vpack.c.b16 %v641, %v625
        %v754 = vpack.c.b16 %v642, %v626
        %v755 = vpack.c.b16 %v643, %v627
        %v756 = vpack.c.b16 %v644, %v628
        %v757 = vpack.c.b16 %v645, %v629
        %v758 = vpack.c.b16 %v646, %v630
        %v759 = vpack.c.b16 %v647, %v631
        %v760 = vpack.c.b16 %v648, %v632
        %v761 = vpack.c.b16 %v649, %v633
        %v762 = vpack.c.b16 %v650, %v634
        %v763 = vpack.c.b16 %v651, %v635
        %v764 = vpack.c.b16 %v652, %v636
        %v765 = vpack.c.b16 %v653, %v637
        %v766 = vpack.c.b16 %v654, %v638
        %v767 = vpack.c.b16 %v655, %v639
        %v768 = vpack.c.b16 %v672, %v656
        %v769 = vpack.c.b16 %v673, %v657
        %v770 = vpack.c.b16 %v674, %v658
        %v771 = vpack.c.b16 %v675, %v659
        %v772 = vpack.c.b16 %v676, %v660
        %v773 = vpack.c.b16 %v677, %v661
        %v774 = vpack.c.b16 %v678, %v662
        %v775 = vpack.c.b16 %v679, %v663
        %v776 = vpack.c.b16 %v680, %v664
        %v777 = vpack.c.b16 %v681, %v665
        %v778 = vpack.c.b16 %v682, %v666
        %v779 = vpack.c.b16 %v683, %v667
        %v780 = vpack.c.b16 %v684, %v668
        %v781 = vpack.c.b16 %v685, %v669
        %v782 = vpack.c.b16 %v686, %v670
        %v783 = vpack.c.b16 %v687, %v671
        %v784 = vpack.c.b16 %v704, %v688
        %v785 = vpack.c.b16 %v705, %v689
        %v786 = vpack.c.b16 %v706, %v690
        %v787 = vpack.c.b16 %v707, %v691
        %v788 = vpack.c.b16 %v708, %v692
        %v789 = vpack.c.b16 %v709, %v693
        %v790 = vpack.c.b16 %v710, %v694
        %v791 = vpack.c.b16 %v711, %v695
        %v792 = vpack.c.b16 %v712, %v696
        %v793 = vpack.c.b16 %v713, %v697
        %v794 = vpack.c.b16 %v714, %v698
        %v795 = vpack.c.b16 %v715, %v699
        %v796 = vpack.c.b16 %v716, %v700
        %v797 = vpack.c.b16 %v717, %v701
        %v798 = vpack.c.b16 %v718, %v702
        %v799 = vpack.c.b16 %v719, %v703
        %v800 = vpack.c.b16 %v736, %v720
        %v801 = vpack.c.b16 %v737, %v721
        %v802 = vpack.c.b16 %v738, %v722
        %v803 = vpack.c.b16 %v739, %v723
        %v804 = vpack.c.b16 %v740, %v724
        %v805 = vpack.c.b16 %v741, %v725
        %v806 = vpack.c.b16 %v742, %v726
        %v807 = vpack.c.b16 %v743, %v727
        %v808 = vpack.c.b16 %v744, %v728
        %v809 = vpack.c.b16 %v745, %v729
        %v810 = vpack.c.b16 %v746, %v730
        %v811 = vpack.c.b16 %v747, %v731
        %v812 = vpack.c.b16 %v748, %v732
        %v813 = vpack.c.b16 %v749, %v733
        %v814 = vpack.c.b16 %v750, %v734
        %v815 = vpack.c.b16 %v751, %v735
        %v1136 = vunpack.c.l.b16 %v304
        %v1137 = vunpack.c.h.b16 %v304
        %v1138 = vunpack.c.l.b16 %v305
        %v1139 = vunpack.c.h.b16 %v305
        %v1140 = vunpack.c.l.b16 %v306
        %v1141 = vunpack.c.h.b16 %v306
        %v1142 = vunpack.c.l.b16 %v307
        %v1143 = vunpack.c.h.b16 %v307
        %v1144 = vunpack.c.l.b16 %v308
        %v1145 = vunpack.c.h.b16 %v308
        %v1146 = vunpack.c.l.b16 %v309
        %v1147 = vunpack.c.h.b16 %v309
        %v1148 = vunpack.c.l.b16 %v310
        %v1149 = vunpack.c.h.b16 %v310
        %v1150 = vunpack.c.l.b16 %v311
        %v1151 = vunpack.c.h.b16 %v311
        %v1152 = vunpack.c.l.b16 %v312
        %v1153 = vunpack.c.h.b16 %v312
        %v1154 = vunpack.c.l.b16 %v313
        %v1155 = vunpack.c.h.b16 %v313
        %v1156 = vunpack.c.l.b16 %v314
        %v1157 = vunpack.c.h.b16 %v314
        %v1158 = vunpack.c.l.b16 %v315
        %v1159 = vunpack.c.h.b16 %v315
        %v1160 = vunpack.c.l.b16 %v316
        %v1161 = vunpack.c.h.b16 %v316
        %v1162 = vunpack.c.l.b16 %v317
        %v1163 = vunpack.c.h.b16 %v317
        %v1164 = vunpack.c.l.b16 %v318
        %v1165 = vunpack.c.h.b16 %v318
        %v1166 = vunpack.c.l.b16 %v319
        %v1167 = vunpack.c.h.b16 %v319
        %v1168 = vunpack.c.l.b16 %v320
        %v1169 = vunpack.c.h.b16 %v320
        %v1170 = vunpack.c.l.b16 %v321
        %v1171 = vunpack.c.h.b16 %v321
        %v1172 = vunpack.c.l.b16 %v322
        %v1173 = vunpack.c.h.b16 %v322
        %v1174 = vunpack.c.l.b16 %v323
        %v1175 = vunpack.c.h.b16 %v323
        %v1176 = vunpack.c.l.b16 %v324
        %v1177 = vunpack.c.h.b16 %v324
        %v1178 = vunpack.c.l.b16 %v325
        %v1179 = vunpack.c.h.b16 %v325
        %v1180 = vunpack.c.l.b16 %v326
        %v1181 = vunpack.c.h.b16 %v326
        %v1182 = vunpack.c.l.b16 %v327
        %v1183 = vunpack.c.h.b16 %v327
        %v1184 = vunpack.c.l.b16 %v328
        %v1185 = vunpack.c.h.b16 %v328
        %v1186 = vunpack.c.l.b16 %v329
        %v1187 = vunpack.c.h.b16 %v329
        %v1188 = vunpack.c.l.b16 %v330
        %v1189 = vunpack.c.h.b16 %v330
        %v1190 = vunpack.c.l.b16 %v331
        %v1191 = vunpack.c.h.b16 %v331
        %v1192 = vunpack.c.l.b16 %v332
        %v1193 = vunpack.c.h.b16 %v332
        %v1194 = vunpack.c.l.b16 %v333
        %v1195 = vunpack.c.h.b16 %v333
        %v1196 = vunpack.c.l.b16 %v334
        %v1197 = vunpack.c.h.b16 %v334
        %v1198 = vunpack.c.l.b16 %v335
        %v1199 = vunpack.c.h.b16 %v335
        %v1200 = vunpack.c.l.b16 %v336
        %v1201 = vunpack.c.h.b16 %v336
        %v1202 = vunpack.c.l.b16 %v337
        %v1203 = vunpack.c.h.b16 %v337
        %v1204 = vunpack.c.l.b16 %v338
        %v1205 = vunpack.c.h.b16 %v338
        %v1206 = vunpack.c.l.b16 %v339
        %v1207 = vunpack.c.h.b16 %v339
        %v1208 = vunpack.c.l.b16 %v340
        %v1209 = vunpack.c.h.b16 %v340
        %v1210 = vunpack.c.l.b16 %v341
        %v1211 = vunpack.c.h.b16 %v341
        %v1212 = vunpack.c.l.b16 %v342
        %v1213 = vunpack.c.h.b16 %v342
        %v1214 = vunpack.c.l.b16 %v343
        %v1215 = vunpack.c.h.b16 %v343
        %v1216 = vunpack.c.l.b16 %v344
        %v1217 = vunpack.c.h.b16 %v344
        %v1218 = vunpack.c.l.b16 %v345
        %v1219 = vunpack.c.h.b16 %v345
        %v1220 = vunpack.c.l.b16 %v346
        %v1221 = vunpack.c.h.b16 %v346
        %v1222 = vunpack.c.l.b16 %v347
        %v1223 = vunpack.c.h.b16 %v347
        %v1224 = vunpack.c.l.b16 %v348
        %v1225 = vunpack.c.h.b16 %v348
        %v1226 = vunpack.c.l.b16 %v349
        %v1227 = vunpack.c.h.b16 %v349
        %v1228 = vunpack.c.l.b16 %v350
        %v1229 = vunpack.c.h.b16 %v350
        %v1230 = vunpack.c.l.b16 %v351
        %v1231 = vunpack.c.h.b16 %v351
        %v1232 = vunpack.c.l.b16 %v352
        %v1233 = vunpack.c.h.b16 %v352
        %v1234 = vunpack.c.l.b16 %v353
        %v1235 = vunpack.c.h.b16 %v353
        %v1236 = vunpack.c.l.b16 %v354
        %v1237 = vunpack.c.h.b16 %v354
        %v1238 = vunpack.c.l.b16 %v355
        %v1239 = vunpack.c.h.b16 %v355
        %v1240 = vunpack.c.l.b16 %v356
        %v1241 = vunpack.c.h.b16 %v356
        %v1242 = vunpack.c.l.b16 %v357
        %v1243 = vunpack.c.h.b16 %v357
        %v1244 = vunpack.c.l.b16 %v358
        %v1245 = vunpack.c.h.b16 %v358
        %v1246 = vunpack.c.l.b16 %v359
        %v1247 = vunpack.c.h.b16 %v359
        %v1248 = vunpack.c.l.b16 %v360
        %v1249 = vunpack.c.h.b16 %v360
        %v1250 = vunpack.c.l.b16 %v361
        %v1251 = vunpack.c.h.b16 %v361
        %v1252 = vunpack.c.l.b16 %v362
        %v1253 = vunpack.c.h.b16 %v362
        %v1254 = vunpack.c.l.b16 %v363
        %v1255 = vunpack.c.h.b16 %v363
        %v1256 = vunpack.c.l.b16 %v364
        %v1257 = vunpack.c.h.b16 %v364
        %v1258 = vunpack.c.l.b16 %v365
        %v1259 = vunpack.c.h.b16 %v365
        %v1260 = vunpack.c.l.b16 %v366
        %v1261 = vunpack.c.h.b16 %v366
        %v1262 = vunpack.c.l.b16 %v367
        %v1263 = vunpack.c.h.b16 %v367
        %v1264 = vunpack.c.l.b16 %v368
        %v1265 = vunpack.c.h.b16 %v368
        %v1266 = vunpack.c.l.b16 %v369
        %v1267 = vunpack.c.h.b16 %v369
        %v1268 = vunpack.c.l.b16 %v370
        %v1269 = vunpack.c.h.b16 %v370
        %v1270 = vunpack.c.l.b16 %v371
        %v1271 = vunpack.c.h.b16 %v371
        %v1272 = vunpack.c.l.b16 %v372
        %v1273 = vunpack.c.h.b16 %v372
        %v1274 = vunpack.c.l.b16 %v373
        %v1275 = vunpack.c.h.b16 %v373
        %v1276 = vunpack.c.l.b16 %v374
        %v1277 = vunpack.c.h.b16 %v374
        %v1278 = vunpack.c.l.b16 %v375
        %v1279 = vunpack.c.h.b16 %v375
        %v1280 = vunpack.c.l.b16 %v376
        %v1281 = vunpack.c.h.b16 %v376
        %v1282 = vunpack.c.l.b16 %v377
        %v1283 = vunpack.c.h.b16 %v377
        %v1284 = vunpack.c.l.b16 %v378
        %v1285 = vunpack.c.h.b16 %v378
        %v1286 = vunpack.c.l.b16 %v379
        %v1287 = vunpack.c.h.b16 %v379
        %v1288 = vunpack.c.l.b16 %v380
        %v1289 = vunpack.c.h.b16 %v380
        %v1290 = vunpack.c.l.b16 %v381
        %v1291 = vunpack.c.h.b16 %v381
        %v1292 = vunpack.c.l.b16 %v382
        %v1293 = vunpack.c.h.b16 %v382
        %v1294 = vunpack.c.l.b16 %v383
        %v1295 = vunpack.c.h.b16 %v383
        %v1296 = vunpack.c.l.b16 %v384
        %v1297 = vunpack.c.h.b16 %v384
        %v1298 = vunpack.c.l.b16 %v385
        %v1299 = vunpack.c.h.b16 %v385
        %v1300 = vunpack.c.l.b16 %v386
        %v1301 = vunpack.c.h.b16 %v386
        %v1302 = vunpack.c.l.b16 %v387
        %v1303 = vunpack.c.h.b16 %v387
        %v1304 = vunpack.c.l.b16 %v388
        %v1305 = vunpack.c.h.b16 %v388
        %v1306 = vunpack.c.l.b16 %v389
        %v1307 = vunpack.c.h.b16 %v389
        %v1308 = vunpack.c.l.b16 %v390
        %v1309 = vunpack.c.h.b16 %v390
        %v1310 = vunpack.c.l.b16 %v391
        %v1311 = vunpack.c.h.b16 %v391
        %v1312 = vunpack.c.l.b16 %v392
        %v1313 = vunpack.c.h.b16 %v392
        %v1314 = vunpack.c.l.b16 %v393
        %v1315 = vunpack.c.h.b16 %v393
        %v1316 = vunpack.c.l.b16 %v394
        %v1317 = vunpack.c.h.b16 %v394
        %v1318 = vunpack.c.l.b16 %v395
        %v1319 = vunpack.c.h.b16 %v395
        %v1320 = vunpack.c.l.b16 %v396
        %v1321 = vunpack.c.h.b16 %v396
        %v1322 = vunpack.c.l.b16 %v397
        %v1323 = vunpack.c.h.b16 %v397
        %v1324 = vunpack.c.l.b16 %v398
        %v1325 = vunpack.c.h.b16 %v398
        %v1326 = vunpack.c.l.b16 %v399
        %v1327 = vunpack.c.h.b16 %v399
        %v1328 = vunpack.c.l.b16 %v400
        %v1329 = vunpack.c.h.b16 %v400
        %v1330 = vunpack.c.l.b16 %v401
        %v1331 = vunpack.c.h.b16 %v401
        %v1332 = vunpack.c.l.b16 %v402
        %v1333 = vunpack.c.h.b16 %v402
        %v1334 = vunpack.c.l.b16 %v403
        %v1335 = vunpack.c.h.b16 %v403
        %v1336 = vunpack.c.l.b16 %v404
        %v1337 = vunpack.c.h.b16 %v404
        %v1338 = vunpack.c.l.b16 %v405
        %v1339 = vunpack.c.h.b16 %v405
        %v1340 = vunpack.c.l.b16 %v406
        %v1341 = vunpack.c.h.b16 %v406
        %v1342 = vunpack.c.l.b16 %v407
        %v1343 = vunpack.c.h.b16 %v407
        %v1344 = vunpack.c.l.b16 %v408
        %v1345 = vunpack.c.h.b16 %v408
        %v1346 = vunpack.c.l.b16 %v409
        %v1347 = vunpack.c.h.b16 %v409
        %v1348 = vunpack.c.l.b16 %v410
        %v1349 = vunpack.c.h.b16 %v410
        %v1350 = vunpack.c.l.b16 %v411
        %v1351 = vunpack.c.h.b16 %v411
        %v1352 = vunpack.c.l.b16 %v412
        %v1353 = vunpack.c.h.b16 %v412
        %v1354 = vunpack.c.l.b16 %v413
        %v1355 = vunpack.c.h.b16 %v413
        %v1356 = vunpack.c.l.b16 %v414
        %v1357 = vunpack.c.h.b16 %v414
        %v1358 = vunpack.c.l.b16 %v415
        %v1359 = vunpack.c.h.b16 %v415
        %v1360 = vunpack.c.l.b16 %v416
        %v1361 = vunpack.c.h.b16 %v416
        %v1362 = vunpack.c.l.b16 %v417
        %v1363 = vunpack.c.h.b16 %v417
        %v1364 = vunpack.c.l.b16 %v418
        %v1365 = vunpack.c.h.b16 %v418
        %v1366 = vunpack.c.l.b16 %v419
        %v1367 = vunpack.c.h.b16 %v419
        %v1368 = vunpack.c.l.b16 %v420
        %v1369 = vunpack.c.h.b16 %v420
        %v1370 = vunpack.c.l.b16 %v421
        %v1371 = vunpack.c.h.b16 %v421
        %v1372 = vunpack.c.l.b16 %v422
        %v1373 = vunpack.c.h.b16 %v422
        %v1374 = vunpack.c.l.b16 %v423
        %v1375 = vunpack.c.h.b16 %v423
        %v1376 = vunpack.c.l.b16 %v424
        %v1377 = vunpack.c.h.b16 %v424
        %v1378 = vunpack.c.l.b16 %v425
        %v1379 = vunpack.c.h.b16 %v425
        %v1380 = vunpack.c.l.b16 %v426
        %v1381 = vunpack.c.h.b16 %v426
        %v1382 = vunpack.c.l.b16 %v427
        %v1383 = vunpack.c.h.b16 %v427
        %v1384 = vunpack.c.l.b16 %v428
        %v1385 = vunpack.c.h.b16 %v428
        %v1386 = vunpack.c.l.b16 %v429
        %v1387 = vunpack.c.h.b16 %v429
        %v1388 = vunpack.c.l.b16 %v430
        %v1389 = vunpack.c.h.b16 %v430
        %v1390 = vunpack.c.l.b16 %v431
        %v1391 = vunpack.c.h.b16 %v431
        %v1392 = vunpack.c.l.b16 %v432
        %v1393 = vunpack.c.h.b16 %v432
        %v1394 = vunpack.c.l.b16 %v433
        %v1395 = vunpack.c.h.b16 %v433
        %v1396 = vunpack.c.l.b16 %v434
        %v1397 = vunpack.c.h.b16 %v434
        %v1398 = vunpack.c.l.b16 %v435
        %v1399 = vunpack.c.h.b16 %v435
        %v1400 = vunpack.c.l.b16 %v436
        %v1401 = vunpack.c.h.b16 %v436
        %v1402 = vunpack.c.l.b16 %v437
        %v1403 = vunpack.c.h.b16 %v437
        %v1404 = vunpack.c.l.b16 %v438
        %v1405 = vunpack.c.h.b16 %v438
        %v1406 = vunpack.c.l.b16 %v439
        %v1407 = vunpack.c.h.b16 %v439
        %v1408 = vunpack.c.l.b16 %v440
        %v1409 = vunpack.c.h.b16 %v440
        %v1410 = vunpack.c.l.b16 %v441
        %v1411 = vunpack.c.h.b16 %v441
        %v1412 = vunpack.c.l.b16 %v442
        %v1413 = vunpack.c.h.b16 %v442
        %v1414 = vunpack.c.l.b16 %v443
        %v1415 = vunpack.c.h.b16 %v443
        %v1416 = vunpack.c.l.b16 %v444
        %v1417 = vunpack.c.h.b16 %v444
        %v1418 = vunpack.c.l.b16 %v445
        %v1419 = vunpack.c.h.b16 %v445
        %v1420 = vunpack.c.l.b16 %v446
        %v1421 = vunpack.c.h.b16 %v446
        %v1422 = vunpack.c.l.b16 %v447
        %v1423 = vunpack.c.h.b16 %v447
        %v1424 = vunpack.c.l.b16 %v448
        %v1425 = vunpack.c.h.b16 %v448
        %v1426 = vunpack.c.l.b16 %v449
        %v1427 = vunpack.c.h.b16 %v449
        %v1428 = vunpack.c.l.b16 %v450
        %v1429 = vunpack.c.h.b16 %v450
        %v1430 = vunpack.c.l.b16 %v451
        %v1431 = vunpack.c.h.b16 %v451
        %v1432 = vunpack.c.l.b16 %v452
        %v1433 = vunpack.c.h.b16 %v452
        %v1434 = vunpack.c.l.b16 %v453
        %v1435 = vunpack.c.h.b16 %v453
        %v1436 = vunpack.c.l.b16 %v454
        %v1437 = vunpack.c.h.b16 %v454
        %v1438 = vunpack.c.l.b16 %v455
        %v1439 = vunpack.c.h.b16 %v455
        %v1440 = vunpack.c.l.b16 %v456
        %v1441 = vunpack.c.h.b16 %v456
        %v1442 = vunpack.c.l.b16 %v457
        %v1443 = vunpack.c.h.b16 %v457
        %v1444 = vunpack.c.l.b16 %v458
        %v1445 = vunpack.c.h.b16 %v458
        %v1446 = vunpack.c.l.b16 %v459
        %v1447 = vunpack.c.h.b16 %v459
        %v1448 = vunpack.c.l.b16 %v460
        %v1449 = vunpack.c.h.b16 %v460
        %v1450 = vunpack.c.l.b16 %v461
        %v1451 = vunpack.c.h.b16 %v461
        %v1452 = vunpack.c.l.b16 %v462
        %v1453 = vunpack.c.h.b16 %v462
        %v1454 = vunpack.c.l.b16 %v463
        %v1455 = vunpack.c.h.b16 %v463
        %v1456 = vunpack.c.l.b16 %v464
        %v1457 = vunpack.c.h.b16 %v464
        %v1458 = vunpack.c.l.b16 %v465
        %v1459 = vunpack.c.h.b16 %v465
        %v1460 = vunpack.c.l.b16 %v466
        %v1461 = vunpack.c.h.b16 %v466
        %v1462 = vunpack.c.l.b16 %v467
        %v1463 = vunpack.c.h.b16 %v467
        %v1464 = vunpack.c.l.b16 %v468
        %v1465 = vunpack.c.h.b16 %v468
        %v1466 = vunpack.c.l.b16 %v469
        %v1467 = vunpack.c.h.b16 %v469
        %v1468 = vunpack.c.l.b16 %v470
        %v1469 = vunpack.c.h.b16 %v470
        %v1470 = vunpack.c.l.b16 %v471
        %v1471 = vunpack.c.h.b16 %v471
        %v1472 = vunpack.c.l.b16 %v472
        %v1473 = vunpack.c.h.b16 %v472
        %v1474 = vunpack.c.l.b16 %v473
        %v1475 = vunpack.c.h.b16 %v473
        %v1476 = vunpack.c.l.b16 %v474
        %v1477 = vunpack.c.h.b16 %v474
        %v1478 = vunpack.c.l.b16 %v475
        %v1479 = vunpack.c.h.b16 %v475
        %v1480 = vunpack.c.l.b16 %v476
        %v1481 = vunpack.c.h.b16 %v476
        %v1482 = vunpack.c.l.b16 %v477
        %v1483 = vunpack.c.h.b16 %v477
        %v1484 = vunpack.c.l.b16 %v478
        %v1485 = vunpack.c.h.b16 %v478
        %v1486 = vunpack.c.l.b16 %v479
        %v1487 = vunpack.c.h.b16 %v479
        %v1488 = vunpack.c.l.b16 %v480
        %v1489 = vunpack.c.h.b16 %v480
        %v1490 = vunpack.c.l.b16 %v481
        %v1491 = vunpack.c.h.b16 %v481
        %v1492 = vunpack.c.l.b16 %v482
        %v1493 = vunpack.c.h.b16 %v482
        %v1494 = vunpack.c.l.b16 %v483
        %v1495 = vunpack.c.h.b16 %v483
        %v1496 = vunpack.c.l.b16 %v484
        %v1497 = vunpack.c.h.b16 %v484
        %v1498 = vunpack.c.l.b16 %v485
        %v1499 = vunpack.c.h.b16 %v485
        %v1500 = vunpack.c.l.b16 %v486
        %v1501 = vunpack.c.h.b16 %v486
        %v1502 = vunpack.c.l.b16 %v487
        %v1503 = vunpack.c.h.b16 %v487
        %v1504 = vunpack.c.l.b16 %v488
        %v1505 = vunpack.c.h.b16 %v488
        %v1506 = vunpack.c.l.b16 %v489
        %v1507 = vunpack.c.h.b16 %v489
        %v1508 = vunpack.c.l.b16 %v490
        %v1509 = vunpack.c.h.b16 %v490
        %v1510 = vunpack.c.l.b16 %v491
        %v1511 = vunpack.c.h.b16 %v491
        %v1512 = vunpack.c.l.b16 %v492
        %v1513 = vunpack.c.h.b16 %v492
        %v1514 = vunpack.c.l.b16 %v493
        %v1515 = vunpack.c.h.b16 %v493
        %v1516 = vunpack.c.l.b16 %v494
        %v1517 = vunpack.c.h.b16 %v494
        %v1518 = vunpack.c.l.b16 %v495
        %v1519 = vunpack.c.h.b16 %v495
        %v1520 = vunpack.c.l.b16 %v496
        %v1521 = vunpack.c.h.b16 %v496
        %v1522 = vunpack.c.l.b16 %v497
        %v1523 = vunpack.c.h.b16 %v497
        %v1524 = vunpack.c.l.b16 %v498
        %v1525 = vunpack.c.h.b16 %v498
        %v1526 = vunpack.c.l.b16 %v499
        %v1527 = vunpack.c.h.b16 %v499
        %v1528 = vunpack.c.l.b16 %v500
        %v1529 = vunpack.c.h.b16 %v500
        %v1530 = vunpack.c.l.b16 %v501
        %v1531 = vunpack.c.h.b16 %v501
        %v1532 = vunpack.c.l.b16 %v502
        %v1533 = vunpack.c.h.b16 %v502
        %v1534 = vunpack.c.l.b16 %v503
        %v1535 = vunpack.c.h.b16 %v503
        %v1536 = vunpack.c.l.b16 %v504
        %v1537 = vunpack.c.h.b16 %v504
        %v1538 = vunpack.c.l.b16 %v505
        %v1539 = vunpack.c.h.b16 %v505
        %v1540 = vunpack.c.l.b16 %v506
        %v1541 = vunpack.c.h.b16 %v506
        %v1542 = vunpack.c.l.b16 %v507
        %v1543 = vunpack.c.h.b16 %v507
        %v1544 = vunpack.c.l.b16 %v508
        %v1545 = vunpack.c.h.b16 %v508
        %v1546 = vunpack.c.l.b16 %v509
        %v1547 = vunpack.c.h.b16 %v509
        %v1548 = vunpack.c.l.b16 %v510
        %v1549 = vunpack.c.h.b16 %v510
        %v1550 = vunpack.c.l.b16 %v511
        %v1551 = vunpack.c.h.b16 %v511
        %v1552 = vunpack.c.l.b16 %v512
        %v1553 = vunpack.c.h.b16 %v512
        %v1554 = vunpack.c.l.b16 %v513
        %v1555 = vunpack.c.h.b16 %v513
        %v1556 = vunpack.c.l.b16 %v514
        %v1557 = vunpack.c.h.b16 %v514
        %v1558 = vunpack.c.l.b16 %v515
        %v1559 = vunpack.c.h.b16 %v515
        %v1560 = vunpack.c.l.b16 %v516
        %v1561 = vunpack.c.h.b16 %v516
        %v1562 = vunpack.c.l.b16 %v517
        %v1563 = vunpack.c.h.b16 %v517
        %v1564 = vunpack.c.l.b16 %v518
        %v1565 = vunpack.c.h.b16 %v518
        %v1566 = vunpack.c.l.b16 %v519
        %v1567 = vunpack.c.h.b16 %v519
        %v1568 = vunpack.c.l.b16 %v520
        %v1569 = vunpack.c.h.b16 %v520
        %v1570 = vunpack.c.l.b16 %v521
        %v1571 = vunpack.c.h.b16 %v521
        %v1572 = vunpack.c.l.b16 %v522
        %v1573 = vunpack.c.h.b16 %v522
        %v1574 = vunpack.c.l.b16 %v523
        %v1575 = vunpack.c.h.b16 %v523
        %v1576 = vunpack.c.l.b16 %v524
        %v1577 = vunpack.c.h.b16 %v524
        %v1578 = vunpack.c.l.b16 %v525
        %v1579 = vunpack.c.h.b16 %v525
        %v1580 = vunpack.c.l.b16 %v526
        %v1581 = vunpack.c.h.b16 %v526
        %v1582 = vunpack.c.l.b16 %v527
        %v1583 = vunpack.c.h.b16 %v527
        %v1584 = vunpack.c.l.b16 %v528
        %v1585 = vunpack.c.h.b16 %v528
        %v1586 = vunpack.c.l.b16 %v529
        %v1587 = vunpack.c.h.b16 %v529
        %v1588 = vunpack.c.l.b16 %v530
        %v1589 = vunpack.c.h.b16 %v530
        %v1590 = vunpack.c.l.b16 %v531
        %v1591 = vunpack.c.h.b16 %v531
        %v1592 = vunpack.c.l.b16 %v532
        %v1593 = vunpack.c.h.b16 %v532
        %v1594 = vunpack.c.l.b16 %v533
        %v1595 = vunpack.c.h.b16 %v533
        %v1596 = vunpack.c.l.b16 %v534
        %v1597 = vunpack.c.h.b16 %v534
        %v1598 = vunpack.c.l.b16 %v535
        %v1599 = vunpack.c.h.b16 %v535
        %v1600 = vunpack.c.l.b16 %v536
        %v1601 = vunpack.c.h.b16 %v536
        %v1602 = vunpack.c.l.b16 %v537
        %v1603 = vunpack.c.h.b16 %v537
        %v1604 = vunpack.c.l.b16 %v538
        %v1605 = vunpack.c.h.b16 %v538
        %v1606 = vunpack.c.l.b16 %v539
        %v1607 = vunpack.c.h.b16 %v539
        %v1608 = vunpack.c.l.b16 %v540
        %v1609 = vunpack.c.h.b16 %v540
        %v1610 = vunpack.c.l.b16 %v541
        %v1611 = vunpack.c.h.b16 %v541
        %v1612 = vunpack.c.l.b16 %v542
        %v1613 = vunpack.c.h.b16 %v542
        %v1614 = vunpack.c.l.b16 %v543
        %v1615 = vunpack.c.h.b16 %v543
        %v1616 = vunpack.c.l.b16 %v544
        %v1617 = vunpack.c.h.b16 %v544
        %v1618 = vunpack.c.l.b16 %v545
        %v1619 = vunpack.c.h.b16 %v545
        %v1620 = vunpack.c.l.b16 %v546
        %v1621 = vunpack.c.h.b16 %v546
        %v1622 = vunpack.c.l.b16 %v547
        %v1623 = vunpack.c.h.b16 %v547
        %v1624 = vunpack.c.l.b16 %v548
        %v1625 = vunpack.c.h.b16 %v548
        %v1626 = vunpack.c.l.b16 %v549
        %v1627 = vunpack.c.h.b16 %v549
        %v1628 = vunpack.c.l.b16 %v550
        %v1629 = vunpack.c.h.b16 %v550
        %v1630 = vunpack.c.l.b16 %v551
        %v1631 = vunpack.c.h.b16 %v551
        %v1632 = vunpack.c.l.b16 %v552
        %v1633 = vunpack.c.h.b16 %v552
        %v1634 = vunpack.c.l.b16 %v553
        %v1635 = vunpack.c.h.b16 %v553
        %v1636 = vunpack.c.l.b16 %v554
        %v1637 = vunpack.c.h.b16 %v554
        %v1638 = vunpack.c.l.b16 %v555
        %v1639 = vunpack.c.h.b16 %v555
        %v1640 = vunpack.c.l.b16 %v556
        %v1641 = vunpack.c.h.b16 %v556
        %v1642 = vunpack.c.l.b16 %v557
        %v1643 = vunpack.c.h.b16 %v557
        %v1644 = vunpack.c.l.b16 %v558
        %v1645 = vunpack.c.h.b16 %v558
        %v1646 = vunpack.c.l.b16 %v559
        %v1647 = vunpack.c.h.b16 %v559
        %v1648 = vpack.c.b16 %v1138, %v1136
        %v1649 = vpack.c.b16 %v1139, %v1137
        %v1650 = vpack.c.b16 %v1142, %v1140
        %v1651 = vpack.c.b16 %v1143, %v1141
        %v1652 = vpack.c.b16 %v1146, %v1144
        %v1653 = vpack.c.b16 %v1147, %v1145
        %v1654 = vpack.c.b16 %v1150, %v1148
        %v1655 = vpack.c.b16 %v1151, %v1149
        %v1656 = vpack.c.b16 %v1154, %v1152
        %v1657 = vpack.c.b16 %v1155, %v1153
        %v1658 = vpack.c.b16 %v1158, %v1156
        %v1659 = vpack.c.b16 %v1159, %v1157
        %v1660 = vpack.c.b16 %v1162, %v1160
        %v1661 = vpack.c.b16 %v1163, %v1161
        %v1662 = vpack.c.b16 %v1166, %v1164
        %v1663 = vpack.c.b16 %v1167, %v1165
        %v1664 = vpack.c.b16 %v1170, %v1168
        %v1665 = vpack.c.b16 %v1171, %v1169
        %v1666 = vpack.c.b16 %v1174, %v1172
        %v1667 = vpack.c.b16 %v1175, %v1173
        %v1668 = vpack.c.b16 %v1178, %v1176
        %v1669 = vpack.c.b16 %v1179, %v1177
        %v1670 = vpack.c.b16 %v1182, %v1180
        %v1671 = vpack.c.b16 %v1183, %v1181
        %v1672 = vpack.c.b16 %v1186, %v1184
        %v1673 = vpack.c.b16 %v1187, %v1185
        %v1674 = vpack.c.b16 %v1190, %v1188
        %v1675 = vpack.c.b16 %v1191, %v1189
        %v1676 = vpack.c.b16 %v1194, %v1192
        %v1677 = vpack.c.b16 %v1195, %v1193
        %v1678 = vpack.c.b16 %v1198, %v1196
        %v1679 = vpack.c.b16 %v1199, %v1197
        %v1680 = vpack.c.b16 %v1202, %v1200
        %v1681 = vpack.c.b16 %v1203, %v1201
        %v1682 = vpack.c.b16 %v1206, %v1204
        %v1683 = vpack.c.b16 %v1207, %v1205
        %v1684 = vpack.c.b16 %v1210, %v1208
        %v1685 = vpack.c.b16 %v1211, %v1209
        %v1686 = vpack.c.b16 %v1214, %v1212
        %v1687 = vpack.c.b16 %v1215, %v1213
        %v1688 = vpack.c.b16 %v1218, %v1216
        %v1689 = vpack.c.b16 %v1219, %v1217
        %v1690 = vpack.c.b16 %v1222, %v1220
        %v1691 = vpack.c.b16 %v1223, %v1221
        %v1692 = vpack.c.b16 %v1226, %v1224
        %v1693 = vpack.c.b16 %v1227, %v1225
        %v1694 = vpack.c.b16 %v1230, %v1228
        %v1695 = vpack.c.b16 %v1231, %v1229
        %v1696 = vpack.c.b16 %v1234, %v1232
        %v1697 = vpack.c.b16 %v1235, %v1233
        %v1698 = vpack.c.b16 %v1238, %v1236
        %v1699 = vpack.c.b16 %v1239, %v1237
        %v1700 = vpack.c.b16 %v1242, %v1240
        %v1701 = vpack.c.b16 %v1243, %v1241
        %v1702 = vpack.c.b16 %v1246, %v1244
        %v1703 = vpack.c.b16 %v1247, %v1245
        %v1704 = vpack.c.b16 %v1250, %v1248
        %v1705 = vpack.c.b16 %v1251, %v1249
        %v1706 = vpack.c.b16 %v1254, %v1252
        %v1707 = vpack.c.b16 %v1255, %v1253
        %v1708 = vpack.c.b16 %v1258, %v1256
        %v1709 = vpack.c.b16 %v1259, %v1257
        %v1710 = vpack.c.b16 %v1262, %v1260
        %v1711 = vpack.c.b16 %v1263, %v1261
        %v1712 = vpack.c.b16 %v1266, %v1264
        %v1713 = vpack.c.b16 %v1267, %v1265
        %v1714 = vpack.c.b16 %v1270, %v1268
        %v1715 = vpack.c.b16 %v1271, %v1269
        %v1716 = vpack.c.b16 %v1274, %v1272
        %v1717 = vpack.c.b16 %v1275, %v1273
        %v1718 = vpack.c.b16 %v1278, %v1276
        %v1719 = vpack.c.b16 %v1279, %v1277
        %v1720 = vpack.c.b16 %v1282, %v1280
        %v1721 = vpack.c.b16 %v1283, %v1281
        %v1722 = vpack.c.b16 %v1286, %v1284
        %v1723 = vpack.c.b16 %v1287, %v1285
        %v1724 = vpack.c.b16 %v1290, %v1288
        %v1725 = vpack.c.b16 %v1291, %v1289
        %v1726 = vpack.c.b16 %v1294, %v1292
        %v1727 = vpack.c.b16 %v1295, %v1293
        %v1728 = vpack.c.b16 %v1298, %v1296
        %v1729 = vpack.c.b16 %v1299, %v1297
        %v1730 = vpack.c.b16 %v1302, %v1300
        %v1731 = vpack.c.b16 %v1303, %v1301
        %v1732 = vpack.c.b16 %v1306, %v1304
        %v1733 = vpack.c.b16 %v1307, %v1305
        %v1734 = vpack.c.b16 %v1310, %v1308
        %v1735 = vpack.c.b16 %v1311, %v1309
        %v1736 = vpack.c.b16 %v1314, %v1312
        %v1737 = vpack.c.b16 %v1315, %v1313
        %v1738 = vpack.c.b16 %v1318, %v1316
        %v1739 = vpack.c.b16 %v1319, %v1317
        %v1740 = vpack.c.b16 %v1322, %v1320
        %v1741 = vpack.c.b16 %v1323, %v1321
        %v1742 = vpack.c.b16 %v1326, %v1324
        %v1743 = vpack.c.b16 %v1327, %v1325
        %v1744 = vpack.c.b16 %v1330, %v1328
        %v1745 = vpack.c.b16 %v1331, %v1329
        %v1746 = vpack.c.b16 %v1334, %v1332
        %v1747 = vpack.c.b16 %v1335, %v1333
        %v1748 = vpack.c.b16 %v1338, %v1336
        %v1749 = vpack.c.b16 %v1339, %v1337
        %v1750 = vpack.c.b16 %v1342, %v1340
        %v1751 = vpack.c.b16 %v1343, %v1341
        %v1752 = vpack.c.b16 %v1346, %v1344
        %v1753 = vpack.c.b16 %v1347, %v1345
        %v1754 = vpack.c.b16 %v1350, %v1348
        %v1755 = vpack.c.b16 %v1351, %v1349
        %v1756 = vpack.c.b16 %v1354, %v1352
        %v1757 = vpack.c.b16 %v1355, %v1353
        %v1758 = vpack.c.b16 %v1358, %v1356
        %v1759 = vpack.c.b16 %v1359, %v1357
        %v1760 = vpack.c.b16 %v1362, %v1360
        %v1761 = vpack.c.b16 %v1363, %v1361
        %v1762 = vpack.c.b16 %v1366, %v1364
        %v1763 = vpack.c.b16 %v1367, %v1365
        %v1764 = vpack.c.b16 %v1370, %v1368
        %v1765 = vpack.c.b16 %v1371, %v1369
        %v1766 = vpack.c.b16 %v1374, %v1372
        %v1767 = vpack.c.b16 %v1375, %v1373
        %v1768 = vpack.c.b16 %v1378, %v1376
        %v1769 = vpack.c.b16 %v1379, %v1377
        %v1770 = vpack.c.b16 %v1382, %v1380
        %v1771 = vpack.c.b16 %v1383, %v1381
        %v1772 = vpack.c.b16 %v1386, %v1384
        %v1773 = vpack.c.b16 %v1387, %v1385
        %v1774 = vpack.c.b16 %v1390, %v1388
        %v1775 = vpack.c.b16 %v1391, %v1389
        %v1776 = vpack.c.b16 %v1394, %v1392
        %v1777 = vpack.c.b16 %v1395, %v1393
        %v1778 = vpack.c.b16 %v1398, %v1396
        %v1779 = vpack.c.b16 %v1399, %v1397
        %v1780 = vpack.c.b16 %v1402, %v1400
        %v1781 = vpack.c.b16 %v1403, %v1401
        %v1782 = vpack.c.b16 %v1406, %v1404
        %v1783 = vpack.c.b16 %v1407, %v1405
        %v1784 = vpack.c.b16 %v1410, %v1408
        %v1785 = vpack.c.b16 %v1411, %v1409
        %v1786 = vpack.c.b16 %v1414, %v1412
        %v1787 = vpack.c.b16 %v1415, %v1413
        %v1788 = vpack.c.b16 %v1418, %v1416
        %v1789 = vpack.c.b16 %v1419, %v1417
        %v1790 = vpack.c.b16 %v1422, %v1420
        %v1791 = vpack.c.b16 %v1423, %v1421
        %v1792 = vpack.c.b16 %v1426, %v1424
        %v1793 = vpack.c.b16 %v1427, %v1425
        %v1794 = vpack.c.b16 %v1430, %v1428
        %v1795 = vpack.c.b16 %v1431, %v1429
        %v1796 = vpack.c.b16 %v1434, %v1432
        %v1797 = vpack.c.b16 %v1435, %v1433
        %v1798 = vpack.c.b16 %v1438, %v1436
        %v1799 = vpack.c.b16 %v1439, %v1437
        %v1800 = vpack.c.b16 %v1442, %v1440
        %v1801 = vpack.c.b16 %v1443, %v1441
        %v1802 = vpack.c.b16 %v1446, %v1444
        %v1803 = vpack.c.b16 %v1447, %v1445
        %v1804 = vpack.c.b16 %v1450, %v1448
        %v1805 = vpack.c.b16 %v1451, %v1449
        %v1806 = vpack.c.b16 %v1454, %v1452
        %v1807 = vpack.c.b16 %v1455, %v1453
        %v1808 = vpack.c.b16 %v1458, %v1456
        %v1809 = vpack.c.b16 %v1459, %v1457
        %v1810 = vpack.c.b16 %v1462, %v1460
        %v1811 = vpack.c.b16 %v1463, %v1461
        %v1812 = vpack.c.b16 %v1466, %v1464
        %v1813 = vpack.c.b16 %v1467, %v1465
        %v1814 = vpack.c.b16 %v1470, %v1468
        %v1815 = vpack.c.b16 %v1471, %v1469
        %v1816 = vpack.c.b16 %v1474, %v1472
        %v1817 = vpack.c.b16 %v1475, %v1473
        %v1818 = vpack.c.b16 %v1478, %v1476
        %v1819 = vpack.c.b16 %v1479, %v1477
        %v1820 = vpack.c.b16 %v1482, %v1480
        %v1821 = vpack.c.b16 %v1483, %v1481
        %v1822 = vpack.c.b16 %v1486, %v1484
        %v1823 = vpack.c.b16 %v1487, %v1485
        %v1824 = vpack.c.b16 %v1490, %v1488
        %v1825 = vpack.c.b16 %v1491, %v1489
        %v1826 = vpack.c.b16 %v1494, %v1492
        %v1827 = vpack.c.b16 %v1495, %v1493
        %v1828 = vpack.c.b16 %v1498, %v1496
        %v1829 = vpack.c.b16 %v1499, %v1497
        %v1830 = vpack.c.b16 %v1502, %v1500
        %v1831 = vpack.c.b16 %v1503, %v1501
        %v1832 = vpack.c.b16 %v1506, %v1504
        %v1833 = vpack.c.b16 %v1507, %v1505
        %v1834 = vpack.c.b16 %v1510, %v1508
        %v1835 = vpack.c.b16 %v1511, %v1509
        %v1836 = vpack.c.b16 %v1514, %v1512
        %v1837 = vpack.c.b16 %v1515, %v1513
        %v1838 = vpack.c.b16 %v1518, %v1516
        %v1839 = vpack.c.b16 %v1519, %v1517
        %v1840 = vpack.c.b16 %v1522, %v1520
        %v1841 = vpack.c.b16 %v1523, %v1521
        %v1842 = vpack.c.b16 %v1526, %v1524
        %v1843 = vpack.c.b16 %v1527, %v1525
        %v1844 = vpack.c.b16 %v1530, %v1528
        %v1845 = vpack.c.b16 %v1531, %v1529
        %v1846 = vpack.c.b16 %v1534, %v1532
        %v1847 = vpack.c.b16 %v1535, %v1533
        %v1848 = vpack.c.b16 %v1538, %v1536
        %v1849 = vpack.c.b16 %v1539, %v1537
        %v1850 = vpack.c.b16 %v1542, %v1540
        %v1851 = vpack.c.b16 %v1543, %v1541
        %v1852 = vpack.c.b16 %v1546, %v1544
        %v1853 = vpack.c.b16 %v1547, %v1545
        %v1854 = vpack.c.b16 %v1550, %v1548
        %v1855 = vpack.c.b16 %v1551, %v1549
        %v1856 = vpack.c.b16 %v1554, %v1552
        %v1857 = vpack.c.b16 %v1555, %v1553
        %v1858 = vpack.c.b16 %v1558, %v1556
        %v1859 = vpack.c.b16 %v1559, %v1557
        %v1860 = vpack.c.b16 %v1562, %v1560
        %v1861 = vpack.c.b16 %v1563, %v1561
        %v1862 = vpack.c.b16 %v1566, %v1564
        %v1863 = vpack.c.b16 %v1567, %v1565
        %v1864 = vpack.c.b16 %v1570, %v1568
        %v1865 = vpack.c.b16 %v1571, %v1569
        %v1866 = vpack.c.b16 %v1574, %v1572
        %v1867 = vpack.c.b16 %v1575, %v1573
        %v1868 = vpack.c.b16 %v1578, %v1576
        %v1869 = vpack.c.b16 %v1579, %v1577
        %v1870 = vpack.c.b16 %v1582, %v1580
        %v1871 = vpack.c.b16 %v1583, %v1581
        %v1872 = vpack.c.b16 %v1586, %v1584
        %v1873 = vpack.c.b16 %v1587, %v1585
        %v1874 = vpack.c.b16 %v1590, %v1588
        %v1875 = vpack.c.b16 %v1591, %v1589
        %v1876 = vpack.c.b16 %v1594, %v1592
        %v1877 = vpack.c.b16 %v1595, %v1593
        %v1878 = vpack.c.b16 %v1598, %v1596
        %v1879 = vpack.c.b16 %v1599, %v1597
        %v1880 = vpack.c.b16 %v1602, %v1600
        %v1881 = vpack.c.b16 %v1603, %v1601
        %v1882 = vpack.c.b16 %v1606, %v1604
        %v1883 = vpack.c.b16 %v1607, %v1605
        %v1884 = vpack.c.b16 %v1610, %v1608
        %v1885 = vpack.c.b16 %v1611, %v1609
        %v1886 = vpack.c.b16 %v1614, %v1612
        %v1887 = vpack.c.b16 %v1615, %v1613
        %v1888 = vpack.c.b16 %v1618, %v1616
        %v1889 = vpack.c.b16 %v1619, %v1617
        %v1890 = vpack.c.b16 %v1622, %v1620
        %v1891 = vpack.c.b16 %v1623, %v1621
        %v1892 = vpack.c.b16 %v1626, %v1624
        %v1893 = vpack.c.b16 %v1627, %v1625
        %v1894 = vpack.c.b16 %v1630, %v1628
        %v1895 = vpack.c.b16 %v1631, %v1629
        %v1896 = vpack.c.b16 %v1634, %v1632
        %v1897 = vpack.c.b16 %v1635, %v1633
        %v1898 = vpack.c.b16 %v1638, %v1636
        %v1899 = vpack.c.b16 %v1639, %v1637
        %v1900 = vpack.c.b16 %v1642, %v1640
        %v1901 = vpack.c.b16 %v1643, %v1641
        %v1902 = vpack.c.b16 %v1646, %v1644
        %v1903 = vpack.c.b16 %v1647, %v1645
        %2160 = vmatprep.subr.bf16.mxu0 %v1649
        %2161 = vmatpush1.bf16.msra.mxu0 %v1648
        %2162 = vmatprep.subr.bf16.mxu0 %v1651
        %2163 = vmatpush1.bf16.msra.mxu0 %v1650
        %2164 = vmatprep.subr.bf16.mxu0 %v1653
        %2165 = vmatpush1.bf16.msra.mxu0 %v1652
        %2166 = vmatprep.subr.bf16.mxu0 %v1655
        %2167 = vmatpush1.bf16.msra.mxu0 %v1654
        %2168 = vmatprep.subr.bf16.mxu0 %v1657
        %2169 = vmatpush1.bf16.msra.mxu0 %v1656
        %2170 = vmatprep.subr.bf16.mxu0 %v1659
        %2171 = vmatpush1.bf16.msra.mxu0 %v1658
        %2172 = vmatprep.subr.bf16.mxu0 %v1661
        %2173 = vmatpush1.bf16.msra.mxu0 %v1660
        %2174 = vmatprep.subr.bf16.mxu0 %v1663
        %2175 = vmatpush1.bf16.msra.mxu0 %v1662
        %2176 = vmatprep.subr.bf16.mxu0 %v1665
        %2177 = vmatpush1.bf16.msra.mxu0 %v1664
        %2178 = vmatprep.subr.bf16.mxu0 %v1667
        %2179 = vmatpush1.bf16.msra.mxu0 %v1666
        %2180 = vmatprep.subr.bf16.mxu0 %v1669
        %2181 = vmatpush1.bf16.msra.mxu0 %v1668
        %2182 = vmatprep.subr.bf16.mxu0 %v1671
        %2183 = vmatpush1.bf16.msra.mxu0 %v1670
        %2184 = vmatprep.subr.bf16.mxu0 %v1673
        %2185 = vmatpush1.bf16.msra.mxu0 %v1672
        %2186 = vmatprep.subr.bf16.mxu0 %v1675
        %2187 = vmatpush1.bf16.msra.mxu0 %v1674
        %2188 = vmatprep.subr.bf16.mxu0 %v1677
        %2189 = vmatpush1.bf16.msra.mxu0 %v1676
        %2190 = vmatprep.subr.bf16.mxu0 %v1679
        %2191 = vmatpush1.bf16.msra.mxu0 %v1678
        %2192 = vmatprep.mubr.bf16.mxu0 %v753
        %2193 = vmatmul.mubr.bf16.gmra.mrb[0].mxu0 %v752
        %v2194 = vpop.f32.mrb[0].mxu0
        %v2195 = vadd.f32 0.0, %v2194
        %v2196 = vpop.f32.mrb[0].mxu0
        %v2197 = vadd.f32 0.0, %v2196
        %v2198 = vpop.f32.mrb[0].mxu0
        %v2199 = vadd.f32 0.0, %v2198
        %v2200 = vpop.f32.mrb[0].mxu0
        %v2201 = vadd.f32 0.0, %v2200
        %2202 = vmatprep.mubr.bf16.mxu0 %v769
        %2203 = vmatmul.mubr.bf16.gmra.mrb[0].mxu0 %v768
        %v2204 = vpop.f32.mrb[0].mxu0
        %v2205 = vadd.f32 0.0, %v2204
        %v2206 = vpop.f32.mrb[0].mxu0
        %v2207 = vadd.f32 0.0, %v2206
        %v2208 = vpop.f32.mrb[0].mxu0
        %v2209 = vadd.f32 0.0, %v2208
        %v2210 = vpop.f32.mrb[0].mxu0
        %v2211 = vadd.f32 0.0, %v2210
        %2212 = vmatprep.mubr.bf16.mxu0 %v785
        %2213 = vmatmul.mubr.bf16.gmra.mrb[0].mxu0 %v784
        %v2214 = vpop.f32.mrb[0].mxu0
        %v2215 = vadd.f32 0.0, %v2214
        %v2216 = vpop.f32.mrb[0].mxu0
        %v2217 = vadd.f32 0.0, %v2216
        %v2218 = vpop.f32.mrb[0].mxu0
        %v2219 = vadd.f32 0.0, %v2218
        %v2220 = vpop.f32.mrb[0].mxu0
        %v2221 = vadd.f32 0.0, %v2220
        %2222 = vmatprep.mubr.bf16.mxu0 %v801
        %2223 = vmatmul.mubr.bf16.gmra.mrb[0].mxu0 %v800
        %v2224 = vpop.f32.mrb[0].mxu0
        %v2225 = vadd.f32 0.0, %v2224
        %v2226 = vpop.f32.mrb[0].mxu0
        %v2227 = vadd.f32 0.0, %v2226
        %v2228 = vpop.f32.mrb[0].mxu0
        %v2229 = vadd.f32 0.0, %v2228
        %v2230 = vpop.f32.mrb[0].mxu0
        %v2231 = vadd.f32 0.0, %v2230
        %2232 = vdwg.mxu0
        %2233 = vmatprep.subr.bf16.mxu0 %v1681
        %2234 = vmatpush1.bf16.msra.mxu0 %v1680
        %2235 = vmatprep.subr.bf16.mxu0 %v1683
        %2236 = vmatpush1.bf16.msra.mxu0 %v1682
        %2237 = vmatprep.subr.bf16.mxu0 %v1685
        %2238 = vmatpush1.bf16.msra.mxu0 %v1684
        %2239 = vmatprep.subr.bf16.mxu0 %v1687
        %2240 = vmatpush1.bf16.msra.mxu0 %v1686
        %2241 = vmatprep.subr.bf16.mxu0 %v1689
        %2242 = vmatpush1.bf16.msra.mxu0 %v1688
        %2243 = vmatprep.subr.bf16.mxu0 %v1691
        %2244 = vmatpush1.bf16.msra.mxu0 %v1690
        %2245 = vmatprep.subr.bf16.mxu0 %v1693
        %2246 = vmatpush1.bf16.msra.mxu0 %v1692
        %2247 = vmatprep.subr.bf16.mxu0 %v1695
        %2248 = vmatpush1.bf16.msra.mxu0 %v1694
        %2249 = vmatprep.subr.bf16.mxu0 %v1697
        %2250 = vmatpush1.bf16.msra.mxu0 %v1696
        %2251 = vmatprep.subr.bf16.mxu0 %v1699
        %2252 = vmatpush1.bf16.msra.mxu0 %v1698
        %2253 = vmatprep.subr.bf16.mxu0 %v1701
        %2254 = vmatpush1.bf16.msra.mxu0 %v1700
        %2255 = vmatprep.subr.bf16.mxu0 %v1703
        %2256 = vmatpush1.bf16.msra.mxu0 %v1702
        %2257 = vmatprep.subr.bf16.mxu0 %v1705
        %2258 = vmatpush1.bf16.msra.mxu0 %v1704
        %2259 = vmatprep.subr.bf16.mxu0 %v1707
        %2260 = vmatpush1.bf16.msra.mxu0 %v1706
        %2261 = vmatprep.subr.bf16.mxu0 %v1709
        %2262 = vmatpush1.bf16.msra.mxu0 %v1708
        %2263 = vmatprep.subr.bf16.mxu0 %v1711
        %2264 = vmatpush1.bf16.msra.mxu0 %v1710
        %2265 = vmatprep.mubr.bf16.mxu0 %v755
        %2266 = vmatmul.mubr.bf16.gmra.mrb[0].mxu0 %v754
        %v2267 = vpop.f32.mrb[0].mxu0
        %v2268 = vadd.f32 %v2195, %v2267
        %v2269 = vpop.f32.mrb[0].mxu0
        %v2270 = vadd.f32 %v2197, %v2269
        %v2271 = vpop.f32.mrb[0].mxu0
        %v2272 = vadd.f32 %v2199, %v2271
        %v2273 = vpop.f32.mrb[0].mxu0
        %v2274 = vadd.f32 %v2201, %v2273
        %2275 = vmatprep.mubr.bf16.mxu0 %v771
        %2276 = vmatmul.mubr.bf16.gmra.mrb[0].mxu0 %v770
        %v2277 = vpop.f32.mrb[0].mxu0
        %v2278 = vadd.f32 %v2205, %v2277
        %v2279 = vpop.f32.mrb[0].mxu0
        %v2280 = vadd.f32 %v2207, %v2279
        %v2281 = vpop.f32.mrb[0].mxu0
        %v2282 = vadd.f32 %v2209, %v2281
        %v2283 = vpop.f32.mrb[0].mxu0
        %v2284 = vadd.f32 %v2211, %v2283
        %2285 = vmatprep.mubr.bf16.mxu0 %v787
        %2286 = vmatmul.mubr.bf16.gmra.mrb[0].mxu0 %v786
        %v2287 = vpop.f32.mrb[0].mxu0
        %v2288 = vadd.f32 %v2215, %v2287
        %v2289 = vpop.f32.mrb[0].mxu0
        %v2290 = vadd.f32 %v2217, %v2289
        %v2291 = vpop.f32.mrb[0].mxu0
        %v2292 = vadd.f32 %v2219, %v2291
        %v2293 = vpop.f32.mrb[0].mxu0
        %v2294 = vadd.f32 %v2221, %v2293
        %2295 = vmatprep.mubr.bf16.mxu0 %v803
        %2296 = vmatmul.mubr.bf16.gmra.mrb[0].mxu0 %v802
        %v2297 = vpop.f32.mrb[0].mxu0
        %v2298 = vadd.f32 %v2225, %v2297
        %v2299 = vpop.f32.mrb[0].mxu0
        %v2300 = vadd.f32 %v2227, %v2299
        %v2301 = vpop.f32.mrb[0].mxu0
        %v2302 = vadd.f32 %v2229, %v2301
        %v2303 = vpop.f32.mrb[0].mxu0
        %v2304 = vadd.f32 %v2231, %v2303
        %2305 = vdwg.mxu0
        %2306 = vmatprep.subr.bf16.mxu0 %v1713
        %2307 = vmatpush1.bf16.msra.mxu0 %v1712
        %2308 = vmatprep.subr.bf16.mxu0 %v1715
        %2309 = vmatpush1.bf16.msra.mxu0 %v1714
        %2310 = vmatprep.subr.bf16.mxu0 %v1717
        %2311 = vmatpush1.bf16.msra.mxu0 %v1716
        %2312 = vmatprep.subr.bf16.mxu0 %v1719
        %2313 = vmatpush1.bf16.msra.mxu0 %v1718
        %2314 = vmatprep.subr.bf16.mxu0 %v1721
        %2315 = vmatpush1.bf16.msra.mxu0 %v1720
        %2316 = vmatprep.subr.bf16.mxu0 %v1723
        %2317 = vmatpush1.bf16.msra.mxu0 %v1722
        %2318 = vmatprep.subr.bf16.mxu0 %v1725
        %2319 = vmatpush1.bf16.msra.mxu0 %v1724
        %2320 = vmatprep.subr.bf16.mxu0 %v1727
        %2321 = vmatpush1.bf16.msra.mxu0 %v1726
        %2322 = vmatprep.subr.bf16.mxu0 %v1729
        %2323 = vmatpush1.bf16.msra.mxu0 %v1728
        %2324 = vmatprep.subr.bf16.mxu0 %v1731
        %2325 = vmatpush1.bf16.msra.mxu0 %v1730
        %2326 = vmatprep.subr.bf16.mxu0 %v1733
        %2327 = vmatpush1.bf16.msra.mxu0 %v1732
        %2328 = vmatprep.subr.bf16.mxu0 %v1735
        %2329 = vmatpush1.bf16.msra.mxu0 %v1734
        %2330 = vmatprep.subr.bf16.mxu0 %v1737
        %2331 = vmatpush1.bf16.msra.mxu0 %v1736
        %2332 = vmatprep.subr.bf16.mxu0 %v1739
        %2333 = vmatpush1.bf16.msra.mxu0 %v1738
        %2334 = vmatprep.subr.bf16.mxu0 %v1741
        %2335 = vmatpush1.bf16.msra.mxu0 %v1740
        %2336 = vmatprep.subr.bf16.mxu0 %v1743
        %2337 = vmatpush1.bf16.msra.mxu0 %v1742
        %2338 = vmatprep.mubr.bf16.mxu0 %v757
        %2339 = vmatmul.mubr.bf16.gmra.mrb[0].mxu0 %v756
        %v2340 = vpop.f32.mrb[0].mxu0
        %v2341 = vadd.f32 %v2268, %v2340
        %v2342 = vpop.f32.mrb[0].mxu0
        %v2343 = vadd.f32 %v2270, %v2342
        %v2344 = vpop.f32.mrb[0].mxu0
        %v2345 = vadd.f32 %v2272, %v2344
        %v2346 = vpop.f32.mrb[0].mxu0
        %v2347 = vadd.f32 %v2274, %v2346
        %2348 = vmatprep.mubr.bf16.mxu0 %v773
        %2349 = vmatmul.mubr.bf16.gmra.mrb[0].mxu0 %v772
        %v2350 = vpop.f32.mrb[0].mxu0
        %v2351 = vadd.f32 %v2278, %v2350
        %v2352 = vpop.f32.mrb[0].mxu0
        %v2353 = vadd.f32 %v2280, %v2352
        %v2354 = vpop.f32.mrb[0].mxu0
        %v2355 = vadd.f32 %v2282, %v2354
        %v2356 = vpop.f32.mrb[0].mxu0
        %v2357 = vadd.f32 %v2284, %v2356
        %2358 = vmatprep.mubr.bf16.mxu0 %v789
        %2359 = vmatmul.mubr.bf16.gmra.mrb[0].mxu0 %v788
        %v2360 = vpop.f32.mrb[0].mxu0
        %v2361 = vadd.f32 %v2288, %v2360
        %v2362 = vpop.f32.mrb[0].mxu0
        %v2363 = vadd.f32 %v2290, %v2362
        %v2364 = vpop.f32.mrb[0].mxu0
        %v2365 = vadd.f32 %v2292, %v2364
        %v2366 = vpop.f32.mrb[0].mxu0
        %v2367 = vadd.f32 %v2294, %v2366
        %2368 = vmatprep.mubr.bf16.mxu0 %v805
        %2369 = vmatmul.mubr.bf16.gmra.mrb[0].mxu0 %v804
        %v2370 = vpop.f32.mrb[0].mxu0
        %v2371 = vadd.f32 %v2298, %v2370
        %v2372 = vpop.f32.mrb[0].mxu0
        %v2373 = vadd.f32 %v2300, %v2372
        %v2374 = vpop.f32.mrb[0].mxu0
        %v2375 = vadd.f32 %v2302, %v2374
        %v2376 = vpop.f32.mrb[0].mxu0
        %v2377 = vadd.f32 %v2304, %v2376
        %2378 = vdwg.mxu0
        %2379 = vmatprep.subr.bf16.mxu0 %v1745
        %2380 = vmatpush1.bf16.msra.mxu0 %v1744
        %2381 = vmatprep.subr.bf16.mxu0 %v1747
        %2382 = vmatpush1.bf16.msra.mxu0 %v1746
        %2383 = vmatprep.subr.bf16.mxu0 %v1749
        %2384 = vmatpush1.bf16.msra.mxu0 %v1748
        %2385 = vmatprep.subr.bf16.mxu0 %v1751
        %2386 = vmatpush1.bf16.msra.mxu0 %v1750
        %2387 = vmatprep.subr.bf16.mxu0 %v1753
        %2388 = vmatpush1.bf16.msra.mxu0 %v1752
        %2389 = vmatprep.subr.bf16.mxu0 %v1755
        %2390 = vmatpush1.bf16.msra.mxu0 %v1754
        %2391 = vmatprep.subr.bf16.mxu0 %v1757
        %2392 = vmatpush1.bf16.msra.mxu0 %v1756
        %2393 = vmatprep.subr.bf16.mxu0 %v1759
        %2394 = vmatpush1.bf16.msra.mxu0 %v1758
        %2395 = vmatprep.subr.bf16.mxu0 %v1761
        %2396 = vmatpush1.bf16.msra.mxu0 %v1760
        %2397 = vmatprep.subr.bf16.mxu0 %v1763
        %2398 = vmatpush1.bf16.msra.mxu0 %v1762
        %2399 = vmatprep.subr.bf16.mxu0 %v1765
        %2400 = vmatpush1.bf16.msra.mxu0 %v1764
        %2401 = vmatprep.subr.bf16.mxu0 %v1767
        %2402 = vmatpush1.bf16.msra.mxu0 %v1766
        %2403 = vmatprep.subr.bf16.mxu0 %v1769
        %2404 = vmatpush1.bf16.msra.mxu0 %v1768
        %2405 = vmatprep.subr.bf16.mxu0 %v1771
        %2406 = vmatpush1.bf16.msra.mxu0 %v1770
        %2407 = vmatprep.subr.bf16.mxu0 %v1773
        %2408 = vmatpush1.bf16.msra.mxu0 %v1772
        %2409 = vmatprep.subr.bf16.mxu0 %v1775
        %2410 = vmatpush1.bf16.msra.mxu0 %v1774
        %2411 = vmatprep.mubr.bf16.mxu0 %v759
        %2412 = vmatmul.mubr.bf16.gmra.mrb[0].mxu0 %v758
        %v2413 = vpop.f32.mrb[0].mxu0
        %v2414 = vadd.f32 %v2341, %v2413
        %v2415 = vpop.f32.mrb[0].mxu0
        %v2416 = vadd.f32 %v2343, %v2415
        %v2417 = vpop.f32.mrb[0].mxu0
        %v2418 = vadd.f32 %v2345, %v2417
        %v2419 = vpop.f32.mrb[0].mxu0
        %v2420 = vadd.f32 %v2347, %v2419
        %2421 = vmatprep.mubr.bf16.mxu0 %v775
        %2422 = vmatmul.mubr.bf16.gmra.mrb[0].mxu0 %v774
        %v2423 = vpop.f32.mrb[0].mxu0
        %v2424 = vadd.f32 %v2351, %v2423
        %v2425 = vpop.f32.mrb[0].mxu0
        %v2426 = vadd.f32 %v2353, %v2425
        %v2427 = vpop.f32.mrb[0].mxu0
        %v2428 = vadd.f32 %v2355, %v2427
        %v2429 = vpop.f32.mrb[0].mxu0
        %v2430 = vadd.f32 %v2357, %v2429
        %2431 = vmatprep.mubr.bf16.mxu0 %v791
        %2432 = vmatmul.mubr.bf16.gmra.mrb[0].mxu0 %v790
        %v2433 = vpop.f32.mrb[0].mxu0
        %v2434 = vadd.f32 %v2361, %v2433
        %v2435 = vpop.f32.mrb[0].mxu0
        %v2436 = vadd.f32 %v2363, %v2435
        %v2437 = vpop.f32.mrb[0].mxu0
        %v2438 = vadd.f32 %v2365, %v2437
        %v2439 = vpop.f32.mrb[0].mxu0
        %v2440 = vadd.f32 %v2367, %v2439
        %2441 = vmatprep.mubr.bf16.mxu0 %v807
        %2442 = vmatmul.mubr.bf16.gmra.mrb[0].mxu0 %v806
        %v2443 = vpop.f32.mrb[0].mxu0
        %v2444 = vadd.f32 %v2371, %v2443
        %v2445 = vpop.f32.mrb[0].mxu0
        %v2446 = vadd.f32 %v2373, %v2445
        %v2447 = vpop.f32.mrb[0].mxu0
        %v2448 = vadd.f32 %v2375, %v2447
        %v2449 = vpop.f32.mrb[0].mxu0
        %v2450 = vadd.f32 %v2377, %v2449
        %2451 = vdwg.mxu0
        %2452 = vmatprep.subr.bf16.mxu0 %v1777
        %2453 = vmatpush1.bf16.msra.mxu0 %v1776
        %2454 = vmatprep.subr.bf16.mxu0 %v1779
        %2455 = vmatpush1.bf16.msra.mxu0 %v1778
        %2456 = vmatprep.subr.bf16.mxu0 %v1781
        %2457 = vmatpush1.bf16.msra.mxu0 %v1780
        %2458 = vmatprep.subr.bf16.mxu0 %v1783
        %2459 = vmatpush1.bf16.msra.mxu0 %v1782
        %2460 = vmatprep.subr.bf16.mxu0 %v1785
        %2461 = vmatpush1.bf16.msra.mxu0 %v1784
        %2462 = vmatprep.subr.bf16.mxu0 %v1787
        %2463 = vmatpush1.bf16.msra.mxu0 %v1786
        %2464 = vmatprep.subr.bf16.mxu0 %v1789
        %2465 = vmatpush1.bf16.msra.mxu0 %v1788
        %2466 = vmatprep.subr.bf16.mxu0 %v1791
        %2467 = vmatpush1.bf16.msra.mxu0 %v1790
        %2468 = vmatprep.subr.bf16.mxu0 %v1793
        %2469 = vmatpush1.bf16.msra.mxu0 %v1792
        %2470 = vmatprep.subr.bf16.mxu0 %v1795
        %2471 = vmatpush1.bf16.msra.mxu0 %v1794
        %2472 = vmatprep.subr.bf16.mxu0 %v1797
        %2473 = vmatpush1.bf16.msra.mxu0 %v1796
        %2474 = vmatprep.subr.bf16.mxu0 %v1799
        %2475 = vmatpush1.bf16.msra.mxu0 %v1798
        %2476 = vmatprep.subr.bf16.mxu0 %v1801
        %2477 = vmatpush1.bf16.msra.mxu0 %v1800
        %2478 = vmatprep.subr.bf16.mxu0 %v1803
        %2479 = vmatpush1.bf16.msra.mxu0 %v1802
        %2480 = vmatprep.subr.bf16.mxu0 %v1805
        %2481 = vmatpush1.bf16.msra.mxu0 %v1804
        %2482 = vmatprep.subr.bf16.mxu0 %v1807
        %2483 = vmatpush1.bf16.msra.mxu0 %v1806
        %2484 = vmatprep.mubr.bf16.mxu0 %v761
        %2485 = vmatmul.mubr.bf16.gmra.mrb[0].mxu0 %v760
        %v2486 = vpop.f32.mrb[0].mxu0
        %v2487 = vadd.f32 %v2414, %v2486
        %v2488 = vpop.f32.mrb[0].mxu0
        %v2489 = vadd.f32 %v2416, %v2488
        %v2490 = vpop.f32.mrb[0].mxu0
        %v2491 = vadd.f32 %v2418, %v2490
        %v2492 = vpop.f32.mrb[0].mxu0
        %v2493 = vadd.f32 %v2420, %v2492
        %2494 = vmatprep.mubr.bf16.mxu0 %v777
        %2495 = vmatmul.mubr.bf16.gmra.mrb[0].mxu0 %v776
        %v2496 = vpop.f32.mrb[0].mxu0
        %v2497 = vadd.f32 %v2424, %v2496
        %v2498 = vpop.f32.mrb[0].mxu0
        %v2499 = vadd.f32 %v2426, %v2498
        %v2500 = vpop.f32.mrb[0].mxu0
        %v2501 = vadd.f32 %v2428, %v2500
        %v2502 = vpop.f32.mrb[0].mxu0
        %v2503 = vadd.f32 %v2430, %v2502
        %2504 = vmatprep.mubr.bf16.mxu0 %v793
        %2505 = vmatmul.mubr.bf16.gmra.mrb[0].mxu0 %v792
        %v2506 = vpop.f32.mrb[0].mxu0
        %v2507 = vadd.f32 %v2434, %v2506
        %v2508 = vpop.f32.mrb[0].mxu0
        %v2509 = vadd.f32 %v2436, %v2508
        %v2510 = vpop.f32.mrb[0].mxu0
        %v2511 = vadd.f32 %v2438, %v2510
        %v2512 = vpop.f32.mrb[0].mxu0
        %v2513 = vadd.f32 %v2440, %v2512
        %2514 = vmatprep.mubr.bf16.mxu0 %v809
        %2515 = vmatmul.mubr.bf16.gmra.mrb[0].mxu0 %v808
        %v2516 = vpop.f32.mrb[0].mxu0
        %v2517 = vadd.f32 %v2444, %v2516
        %v2518 = vpop.f32.mrb[0].mxu0
        %v2519 = vadd.f32 %v2446, %v2518
        %v2520 = vpop.f32.mrb[0].mxu0
        %v2521 = vadd.f32 %v2448, %v2520
        %v2522 = vpop.f32.mrb[0].mxu0
        %v2523 = vadd.f32 %v2450, %v2522
        %2524 = vdwg.mxu0
        %2525 = vmatprep.subr.bf16.mxu0 %v1809
        %2526 = vmatpush1.bf16.msra.mxu0 %v1808
        %2527 = vmatprep.subr.bf16.mxu0 %v1811
        %2528 = vmatpush1.bf16.msra.mxu0 %v1810
        %2529 = vmatprep.subr.bf16.mxu0 %v1813
        %2530 = vmatpush1.bf16.msra.mxu0 %v1812
        %2531 = vmatprep.subr.bf16.mxu0 %v1815
        %2532 = vmatpush1.bf16.msra.mxu0 %v1814
        %2533 = vmatprep.subr.bf16.mxu0 %v1817
        %2534 = vmatpush1.bf16.msra.mxu0 %v1816
        %2535 = vmatprep.subr.bf16.mxu0 %v1819
        %2536 = vmatpush1.bf16.msra.mxu0 %v1818
        %2537 = vmatprep.subr.bf16.mxu0 %v1821
        %2538 = vmatpush1.bf16.msra.mxu0 %v1820
        %2539 = vmatprep.subr.bf16.mxu0 %v1823
        %2540 = vmatpush1.bf16.msra.mxu0 %v1822
        %2541 = vmatprep.subr.bf16.mxu0 %v1825
        %2542 = vmatpush1.bf16.msra.mxu0 %v1824
        %2543 = vmatprep.subr.bf16.mxu0 %v1827
        %2544 = vmatpush1.bf16.msra.mxu0 %v1826
        %2545 = vmatprep.subr.bf16.mxu0 %v1829
        %2546 = vmatpush1.bf16.msra.mxu0 %v1828
        %2547 = vmatprep.subr.bf16.mxu0 %v1831
        %2548 = vmatpush1.bf16.msra.mxu0 %v1830
        %2549 = vmatprep.subr.bf16.mxu0 %v1833
        %2550 = vmatpush1.bf16.msra.mxu0 %v1832
        %2551 = vmatprep.subr.bf16.mxu0 %v1835
        %2552 = vmatpush1.bf16.msra.mxu0 %v1834
        %2553 = vmatprep.subr.bf16.mxu0 %v1837
        %2554 = vmatpush1.bf16.msra.mxu0 %v1836
        %2555 = vmatprep.subr.bf16.mxu0 %v1839
        %2556 = vmatpush1.bf16.msra.mxu0 %v1838
        %2557 = vmatprep.mubr.bf16.mxu0 %v763
        %2558 = vmatmul.mubr.bf16.gmra.mrb[0].mxu0 %v762
        %v2559 = vpop.f32.mrb[0].mxu0
        %v2560 = vadd.f32 %v2487, %v2559
        %v2561 = vpop.f32.mrb[0].mxu0
        %v2562 = vadd.f32 %v2489, %v2561
        %v2563 = vpop.f32.mrb[0].mxu0
        %v2564 = vadd.f32 %v2491, %v2563
        %v2565 = vpop.f32.mrb[0].mxu0
        %v2566 = vadd.f32 %v2493, %v2565
        %2567 = vmatprep.mubr.bf16.mxu0 %v779
        %2568 = vmatmul.mubr.bf16.gmra.mrb[0].mxu0 %v778
        %v2569 = vpop.f32.mrb[0].mxu0
        %v2570 = vadd.f32 %v2497, %v2569
        %v2571 = vpop.f32.mrb[0].mxu0
        %v2572 = vadd.f32 %v2499, %v2571
        %v2573 = vpop.f32.mrb[0].mxu0
        %v2574 = vadd.f32 %v2501, %v2573
        %v2575 = vpop.f32.mrb[0].mxu0
        %v2576 = vadd.f32 %v2503, %v2575
        %2577 = vmatprep.mubr.bf16.mxu0 %v795
        %2578 = vmatmul.mubr.bf16.gmra.mrb[0].mxu0 %v794
        %v2579 = vpop.f32.mrb[0].mxu0
        %v2580 = vadd.f32 %v2507, %v2579
        %v2581 = vpop.f32.mrb[0].mxu0
        %v2582 = vadd.f32 %v2509, %v2581
        %v2583 = vpop.f32.mrb[0].mxu0
        %v2584 = vadd.f32 %v2511, %v2583
        %v2585 = vpop.f32.mrb[0].mxu0
        %v2586 = vadd.f32 %v2513, %v2585
        %2587 = vmatprep.mubr.bf16.mxu0 %v811
        %2588 = vmatmul.mubr.bf16.gmra.mrb[0].mxu0 %v810
        %v2589 = vpop.f32.mrb[0].mxu0
        %v2590 = vadd.f32 %v2517, %v2589
        %v2591 = vpop.f32.mrb[0].mxu0
        %v2592 = vadd.f32 %v2519, %v2591
        %v2593 = vpop.f32.mrb[0].mxu0
        %v2594 = vadd.f32 %v2521, %v2593
        %v2595 = vpop.f32.mrb[0].mxu0
        %v2596 = vadd.f32 %v2523, %v2595
        %2597 = vdwg.mxu0
        %2598 = vmatprep.subr.bf16.mxu0 %v1841
        %2599 = vmatpush1.bf16.msra.mxu0 %v1840
        %2600 = vmatprep.subr.bf16.mxu0 %v1843
        %2601 = vmatpush1.bf16.msra.mxu0 %v1842
        %2602 = vmatprep.subr.bf16.mxu0 %v1845
        %2603 = vmatpush1.bf16.msra.mxu0 %v1844
        %2604 = vmatprep.subr.bf16.mxu0 %v1847
        %2605 = vmatpush1.bf16.msra.mxu0 %v1846
        %2606 = vmatprep.subr.bf16.mxu0 %v1849
        %2607 = vmatpush1.bf16.msra.mxu0 %v1848
        %2608 = vmatprep.subr.bf16.mxu0 %v1851
        %2609 = vmatpush1.bf16.msra.mxu0 %v1850
        %2610 = vmatprep.subr.bf16.mxu0 %v1853
        %2611 = vmatpush1.bf16.msra.mxu0 %v1852
        %2612 = vmatprep.subr.bf16.mxu0 %v1855
        %2613 = vmatpush1.bf16.msra.mxu0 %v1854
        %2614 = vmatprep.subr.bf16.mxu0 %v1857
        %2615 = vmatpush1.bf16.msra.mxu0 %v1856
        %2616 = vmatprep.subr.bf16.mxu0 %v1859
        %2617 = vmatpush1.bf16.msra.mxu0 %v1858
        %2618 = vmatprep.subr.bf16.mxu0 %v1861
        %2619 = vmatpush1.bf16.msra.mxu0 %v1860
        %2620 = vmatprep.subr.bf16.mxu0 %v1863
        %2621 = vmatpush1.bf16.msra.mxu0 %v1862
        %2622 = vmatprep.subr.bf16.mxu0 %v1865
        %2623 = vmatpush1.bf16.msra.mxu0 %v1864
        %2624 = vmatprep.subr.bf16.mxu0 %v1867
        %2625 = vmatpush1.bf16.msra.mxu0 %v1866
        %2626 = vmatprep.subr.bf16.mxu0 %v1869
        %2627 = vmatpush1.bf16.msra.mxu0 %v1868
        %2628 = vmatprep.subr.bf16.mxu0 %v1871
        %2629 = vmatpush1.bf16.msra.mxu0 %v1870
        %2630 = vmatprep.mubr.bf16.mxu0 %v765
        %2631 = vmatmul.mubr.bf16.gmra.mrb[0].mxu0 %v764
        %v2632 = vpop.f32.mrb[0].mxu0
        %v2633 = vadd.f32 %v2560, %v2632
        %v2634 = vpop.f32.mrb[0].mxu0
        %v2635 = vadd.f32 %v2562, %v2634
        %v2636 = vpop.f32.mrb[0].mxu0
        %v2637 = vadd.f32 %v2564, %v2636
        %v2638 = vpop.f32.mrb[0].mxu0
        %v2639 = vadd.f32 %v2566, %v2638
        %2640 = vmatprep.mubr.bf16.mxu0 %v781
        %2641 = vmatmul.mubr.bf16.gmra.mrb[0].mxu0 %v780
        %v2642 = vpop.f32.mrb[0].mxu0
        %v2643 = vadd.f32 %v2570, %v2642
        %v2644 = vpop.f32.mrb[0].mxu0
        %v2645 = vadd.f32 %v2572, %v2644
        %v2646 = vpop.f32.mrb[0].mxu0
        %v2647 = vadd.f32 %v2574, %v2646
        %v2648 = vpop.f32.mrb[0].mxu0
        %v2649 = vadd.f32 %v2576, %v2648
        %2650 = vmatprep.mubr.bf16.mxu0 %v797
        %2651 = vmatmul.mubr.bf16.gmra.mrb[0].mxu0 %v796
        %v2652 = vpop.f32.mrb[0].mxu0
        %v2653 = vadd.f32 %v2580, %v2652
        %v2654 = vpop.f32.mrb[0].mxu0
        %v2655 = vadd.f32 %v2582, %v2654
        %v2656 = vpop.f32.mrb[0].mxu0
        %v2657 = vadd.f32 %v2584, %v2656
        %v2658 = vpop.f32.mrb[0].mxu0
        %v2659 = vadd.f32 %v2586, %v2658
        %2660 = vmatprep.mubr.bf16.mxu0 %v813
        %2661 = vmatmul.mubr.bf16.gmra.mrb[0].mxu0 %v812
        %v2662 = vpop.f32.mrb[0].mxu0
        %v2663 = vadd.f32 %v2590, %v2662
        %v2664 = vpop.f32.mrb[0].mxu0
        %v2665 = vadd.f32 %v2592, %v2664
        %v2666 = vpop.f32.mrb[0].mxu0
        %v2667 = vadd.f32 %v2594, %v2666
        %v2668 = vpop.f32.mrb[0].mxu0
        %v2669 = vadd.f32 %v2596, %v2668
        %2670 = vdwg.mxu0
        %2671 = vmatprep.subr.bf16.mxu0 %v1873
        %2672 = vmatpush1.bf16.msra.mxu0 %v1872
        %2673 = vmatprep.subr.bf16.mxu0 %v1875
        %2674 = vmatpush1.bf16.msra.mxu0 %v1874
        %2675 = vmatprep.subr.bf16.mxu0 %v1877
        %2676 = vmatpush1.bf16.msra.mxu0 %v1876
        %2677 = vmatprep.subr.bf16.mxu0 %v1879
        %2678 = vmatpush1.bf16.msra.mxu0 %v1878
        %2679 = vmatprep.subr.bf16.mxu0 %v1881
        %2680 = vmatpush1.bf16.msra.mxu0 %v1880
        %2681 = vmatprep.subr.bf16.mxu0 %v1883
        %2682 = vmatpush1.bf16.msra.mxu0 %v1882
        %2683 = vmatprep.subr.bf16.mxu0 %v1885
        %2684 = vmatpush1.bf16.msra.mxu0 %v1884
        %2685 = vmatprep.subr.bf16.mxu0 %v1887
        %2686 = vmatpush1.bf16.msra.mxu0 %v1886
        %2687 = vmatprep.subr.bf16.mxu0 %v1889
        %2688 = vmatpush1.bf16.msra.mxu0 %v1888
        %2689 = vmatprep.subr.bf16.mxu0 %v1891
        %2690 = vmatpush1.bf16.msra.mxu0 %v1890
        %2691 = vmatprep.subr.bf16.mxu0 %v1893
        %2692 = vmatpush1.bf16.msra.mxu0 %v1892
        %2693 = vmatprep.subr.bf16.mxu0 %v1895
        %2694 = vmatpush1.bf16.msra.mxu0 %v1894
        %2695 = vmatprep.subr.bf16.mxu0 %v1897
        %2696 = vmatpush1.bf16.msra.mxu0 %v1896
        %2697 = vmatprep.subr.bf16.mxu0 %v1899
        %2698 = vmatpush1.bf16.msra.mxu0 %v1898
        %2699 = vmatprep.subr.bf16.mxu0 %v1901
        %2700 = vmatpush1.bf16.msra.mxu0 %v1900
        %2701 = vmatprep.subr.bf16.mxu0 %v1903
        %2702 = vmatpush1.bf16.msra.mxu0 %v1902
        %2703 = vmatprep.mubr.bf16.mxu0 %v767
        %2704 = vmatmul.mubr.bf16.gmra.mrb[0].mxu0 %v766
        %v2705 = vpop.f32.mrb[0].mxu0
        %v2706 = vadd.f32 %v2633, %v2705
        %v2707 = vpop.f32.mrb[0].mxu0
        %v2708 = vadd.f32 %v2635, %v2707
        %v2709 = vpop.f32.mrb[0].mxu0
        %v2710 = vadd.f32 %v2637, %v2709
        %v2711 = vpop.f32.mrb[0].mxu0
        %v2712 = vadd.f32 %v2639, %v2711
        %2713 = vmatprep.mubr.bf16.mxu0 %v783
        %2714 = vmatmul.mubr.bf16.gmra.mrb[0].mxu0 %v782
        %v2715 = vpop.f32.mrb[0].mxu0
        %v2716 = vadd.f32 %v2643, %v2715
        %v2717 = vpop.f32.mrb[0].mxu0
        %v2718 = vadd.f32 %v2645, %v2717
        %v2719 = vpop.f32.mrb[0].mxu0
        %v2720 = vadd.f32 %v2647, %v2719
        %v2721 = vpop.f32.mrb[0].mxu0
        %v2722 = vadd.f32 %v2649, %v2721
        %2723 = vmatprep.mubr.bf16.mxu0 %v799
        %2724 = vmatmul.mubr.bf16.gmra.mrb[0].mxu0 %v798
        %v2725 = vpop.f32.mrb[0].mxu0
        %v2726 = vadd.f32 %v2653, %v2725
        %v2727 = vpop.f32.mrb[0].mxu0
        %v2728 = vadd.f32 %v2655, %v2727
        %v2729 = vpop.f32.mrb[0].mxu0
        %v2730 = vadd.f32 %v2657, %v2729
        %v2731 = vpop.f32.mrb[0].mxu0
        %v2732 = vadd.f32 %v2659, %v2731
        %2733 = vmatprep.mubr.bf16.mxu0 %v815
        %2734 = vmatmul.mubr.bf16.gmra.mrb[0].mxu0 %v814
        %v2735 = vpop.f32.mrb[0].mxu0
        %v2736 = vadd.f32 %v2663, %v2735
        %v2737 = vpop.f32.mrb[0].mxu0
        %v2738 = vadd.f32 %v2665, %v2737
        %v2739 = vpop.f32.mrb[0].mxu0
        %v2740 = vadd.f32 %v2667, %v2739
        %v2741 = vpop.f32.mrb[0].mxu0
        %v2742 = vadd.f32 %v2669, %v2741
        %2743 = vdwg.mxu0
        %v2744 = vld [vmem:[%s2] sm:$0x1]
        %v2746 = vlaneseq
        %v2747 = vshrl.u32 %v2746, 7
        %v2748 = vsub.s32 0, %v2747
        %v2749 = vrot.slane %v2744, %v2748
        %v2751 = vadd.f32 %v2706, %v2749
        %v2752 = vadd.f32 %v2710, %v2749
        %v2753 = vadd.f32 %v2716, %v2749
        %v2754 = vadd.f32 %v2720, %v2749
        %v2755 = vadd.f32 %v2726, %v2749
        %v2756 = vadd.f32 %v2730, %v2749
        %v2757 = vadd.f32 %v2736, %v2749
        %v2758 = vadd.f32 %v2740, %v2749
        %v2759 = vmax.f32 %v2751, 0.0
        %v2760 = vmax.f32 %v2752, 0.0
        %v2761 = vmax.f32 %v2753, 0.0
        %v2762 = vmax.f32 %v2754, 0.0
        %v2763 = vmax.f32 %v2755, 0.0
        %v2764 = vmax.f32 %v2756, 0.0
        %v2765 = vmax.f32 %v2757, 0.0
        %v2766 = vmax.f32 %v2758, 0.0
        %2767 = vst [vmem:[%s224] sm:$0xff] %v2759
        %2768 = vst [vmem:[%s224 + $0x8] sm:$0xff] %v2760
        %2769 = vst [vmem:[%s224 + $0x10] sm:$0xff] %v2761
        %2770 = vst [vmem:[%s224 + $0x18] sm:$0xff] %v2762
        %2771 = vst [vmem:[%s224 + $0x20] sm:$0xff] %v2763
        %2772 = vst [vmem:[%s224 + $0x28] sm:$0xff] %v2764
        %2773 = vst [vmem:[%s224 + $0x30] sm:$0xff] %v2765
        %2774 = vst [vmem:[%s224 + $0x38] sm:$0xff] %v2766
        %v2775 = vrot.slane %v2708, 4
        %v2776 = vadd.f32 %v2708, %v2775
        %v2777 = vrot.slane %v2776, 2
        %v2778 = vadd.f32 %v2776, %v2777
        %v2779 = vrot.slane %v2778, 1
        %v2780 = vadd.f32 %v2778, %v2779
        %v2781 = vrot.slane %v2712, 4
        %v2782 = vadd.f32 %v2712, %v2781
        %v2783 = vrot.slane %v2782, 2
        %v2784 = vadd.f32 %v2782, %v2783
        %v2785 = vrot.slane %v2784, 1
        %v2786 = vadd.f32 %v2784, %v2785
        %v2787 = vrot.slane %v2718, 4
        %v2788 = vadd.f32 %v2718, %v2787
        %v2789 = vrot.slane %v2788, 2
        %v2790 = vadd.f32 %v2788, %v2789
        %v2791 = vrot.slane %v2790, 1
        %v2792 = vadd.f32 %v2790, %v2791
        %v2793 = vrot.slane %v2722, 4
        %v2794 = vadd.f32 %v2722, %v2793
        %v2795 = vrot.slane %v2794, 2
        %v2796 = vadd.f32 %v2794, %v2795
        %v2797 = vrot.slane %v2796, 1
        %v2798 = vadd.f32 %v2796, %v2797
        %v2799 = vrot.slane %v2728, 4
        %v2800 = vadd.f32 %v2728, %v2799
        %v2801 = vrot.slane %v2800, 2
        %v2802 = vadd.f32 %v2800, %v2801
        %v2803 = vrot.slane %v2802, 1
        %v2804 = vadd.f32 %v2802, %v2803
        %v2805 = vrot.slane %v2732, 4
        %v2806 = vadd.f32 %v2732, %v2805
        %v2807 = vrot.slane %v2806, 2
        %v2808 = vadd.f32 %v2806, %v2807
        %v2809 = vrot.slane %v2808, 1
        %v2810 = vadd.f32 %v2808, %v2809
        %v2811 = vrot.slane %v2738, 4
        %v2812 = vadd.f32 %v2738, %v2811
        %v2813 = vrot.slane %v2812, 2
        %v2814 = vadd.f32 %v2812, %v2813
        %v2815 = vrot.slane %v2814, 1
        %v2816 = vadd.f32 %v2814, %v2815
        %v2817 = vrot.slane %v2742, 4
        %v2818 = vadd.f32 %v2742, %v2817
        %v2819 = vrot.slane %v2818, 2
        %v2820 = vadd.f32 %v2818, %v2819
        %v2821 = vrot.slane %v2820, 1
        %v2822 = vadd.f32 %v2820, %v2821
        %v2823 = vrcp.pop 8.0
        %v2824 = vmul.f32 %v2780, %v2823
        %v2825 = vmul.f32 %v2786, %v2823
        %v2826 = vmul.f32 %v2792, %v2823
        %v2827 = vmul.f32 %v2798, %v2823
        %v2828 = vmul.f32 %v2804, %v2823
        %v2829 = vmul.f32 %v2810, %v2823
        %v2830 = vmul.f32 %v2816, %v2823
        %v2831 = vmul.f32 %v2822, %v2823
        %v2832 = vld [vmem:[%s3] sm:$0x1]
        %v2834 = vlaneseq
        %v2835 = vshrl.u32 %v2834, 7
        %v2836 = vsub.s32 0, %v2835
        %v2837 = vrot.slane %v2832, %v2836
        %v2839 = vadd.f32 %v2824, %v2837
        %v2840 = vadd.f32 %v2825, %v2837
        %v2841 = vadd.f32 %v2826, %v2837
        %v2842 = vadd.f32 %v2827, %v2837
        %v2843 = vadd.f32 %v2828, %v2837
        %v2844 = vadd.f32 %v2829, %v2837
        %v2845 = vadd.f32 %v2830, %v2837
        %v2846 = vadd.f32 %v2831, %v2837
        %v2855 = vrot.slane %v2840, 7
        %vm2856 = vcmask 1041409
        %v2857 = vsel %vm2856, %v2855, %v2839
        %v2858 = vrot.slane %v2841, 6
        %vm2859 = vcmask 1042434
        %v2860 = vsel %vm2859, %v2858, %v2857
        %v2861 = vrot.slane %v2842, 5
        %vm2862 = vcmask 1043459
        %v2863 = vsel %vm2862, %v2861, %v2860
        %v2864 = vrot.slane %v2843, 4
        %vm2865 = vcmask 1044484
        %v2866 = vsel %vm2865, %v2864, %v2863
        %v2867 = vrot.slane %v2844, 3
        %vm2868 = vcmask 1045509
        %v2869 = vsel %vm2868, %v2867, %v2866
        %v2870 = vrot.slane %v2845, 2
        %vm2871 = vcmask 1046534
        %v2872 = vsel %vm2871, %v2870, %v2869
        %v2873 = vrot.slane %v2846, 1
        %vm2874 = vcmask 1047559
        %v2875 = vsel %vm2874, %v2873, %v2872
        %2877 = vst [vmem:[%s231] sm:$0xff] %v2875
        %s2878 = sand.u32 %s120, 1
        %s2879 = scalar_lea.sflag [#allocation3], %s2878
        %s2880 = sand.u32 %s120, 1
        %s2881 = smul.addr %s2880, 64
        %s2882 = scalar_lea.vmem [#allocation2], %s2881
        %s2883 = sand.u32 %s146, 1
        %s2884 = scalar_lea.sflag [#allocation5], %s2883
        %s2885 = sand.u32 %s146, 1
        %s2886 = smul.addr %s2885, 8
        %s2887 = scalar_lea.vmem [#allocation4], %s2886
        // Predicated region
        $region37: #{_lambda_.1} parent=35 // pred_check
          %p2888 = pneg %p130
        $region38: #{_lambda_.1} parent=35 // pred_check_branch
          %2890 = sbr.rel (%p2888) target = $region40
        $region39: #{_lambda_.1} parent=35 // pred_region
          %s2891 = smul.u32 8, %s23
          %s2893 = ssub.s32 1024, 1024
          %2894 = vsyncadd %s2879, %s2893
          %s2895 = smul.addr %s2891, 128
          %s2896 = scalar_lea.hbm %s4, %s2895
          %s2897 = sshll.u32 %s2882, 4
          %s2898 = int_to_ptr.vmem [resolvable:$true] %s2897
          %2903 = dma.vmem_to_hbm [thread:$0]  %s2898, 1024, %s2896, %s2879, 128, 128, 8
        $region40: #{_lambda_.1} parent=35 // pred_fallthru
          _
        // Predicated region
        $region41: #{_lambda_.1} parent=35 // pred_check
          %p2904 = pneg %p156
        $region42: #{_lambda_.1} parent=35 // pred_check_branch
          %2906 = sbr.rel (%p2904) target = $region44
        $region43: #{_lambda_.1} parent=35 // pred_region
          %s2908 = ssub.s32 128, 128
          %2909 = vsyncadd %s2884, %s2908
          %s2910 = smul.addr %s23, 128
          %s2911 = scalar_lea.hbm %s5, %s2910
          %s2913 = sshll.u32 %s2887, 4
          %s2914 = int_to_ptr.vmem [resolvable:$true] %s2913
          %2916 = dma.vmem_to_hbm [thread:$0]  %s2914, 128, %s2911, %s2884
        $region44: #{_lambda_.1} parent=35 // pred_fallthru
          _
      $region36: #{_lambda_.1} parent=5 // pred_fallthru
        _
      %p2917 = scmp.le.s32.totalorder 2, %s18
      // Predicated region
      $region45: #{_lambda_.1} parent=5 // pred_check
        %p2918 = pneg %p2917
      $region46: #{_lambda_.1} parent=5 // pred_check_branch
        %2920 = sbr.rel (%p2918) target = $region48
      $region47: #{_lambda_.1} parent=5 // pred_region
        %s2921 = ssub.s32 %s18, 2
        // Predicated region
        $region49: #{_lambda_.1} parent=47 // pred_check
          %p2922 = pneg %p136
        $region50: #{_lambda_.1} parent=47 // pred_check_branch
          %2924 = sbr.rel (%p2922) target = $region52
        $region51: #{_lambda_.1} parent=47 // pred_region
          %s2925 = sand.u32 %s121, 1
          %s2926 = scalar_lea.sflag [#allocation3], %s2925
          %s2927 = sand.u32 %s121, 1
          %s2928 = smul.addr %s2927, 64
          %s2929 = scalar_lea.vmem [#allocation2], %s2928
          %2930 = dma.done %s2926, 1024
        $region52: #{_lambda_.1} parent=47 // pred_fallthru
          _
        // Predicated region
        $region53: #{_lambda_.1} parent=47 // pred_check
          %p2931 = pneg %p162
        $region54: #{_lambda_.1} parent=47 // pred_check_branch
          %2933 = sbr.rel (%p2931) target = $region56
        $region55: #{_lambda_.1} parent=47 // pred_region
          %s2934 = sand.u32 %s147, 1
          %s2935 = scalar_lea.sflag [#allocation5], %s2934
          %s2936 = sand.u32 %s147, 1
          %s2937 = smul.addr %s2936, 8
          %s2938 = scalar_lea.vmem [#allocation4], %s2937
          %2939 = dma.done %s2935, 128
        $region56: #{_lambda_.1} parent=47 // pred_fallthru
          _
      $region48: #{_lambda_.1} parent=5 // pred_fallthru
        _
    $region6: #{_lambda_.1} parent=1 // loop_footer
      %s22 = sadd.s32 1, %s18
    $region7: #{_lambda_.1} parent=1 // loop_footer_branch
      %17 = sbr.rel target = $region3
    $region8: #{_lambda_.1} parent=1 // loop_exit
      _
    %2940 = vsyncpa [#allocation3], 1
    %s2941 = scalar_lea.sflag [#allocation3], 1
    %2942 = vsyncpa %s2941, 1
    %2943 = vsyncpa [#allocation5], 1
    %s2944 = scalar_lea.sflag [#allocation5], 1
    %2945 = vsyncpa %s2944, 1

</llo_original>
